<compile_context>
chip_gen: v6e
topology: v6e:2x2x1
jax: 0.10.0
libtpu: 0.0.40
codegen_flags: <defaults>
</compile_context>

<pallas_src>
import functools
import math

import jax
import jax.numpy as jnp
from jax import lax
from jax.experimental import pallas as pl
from jax.experimental.pallas import tpu as pltpu


def _round_up(x, m):
    return ((x + m - 1) // m) * m


def _nbytes(shape, dtype):
    return math.prod(shape) * jnp.dtype(dtype).itemsize


def encoder_kernel(x_ref, wih_ref, whh_ref, b_ref, wheads_ref, bheads_ref,
                   heads_ref, hidden_ref,
                   gx_scr, h_scr, c_scr,
                   *, seq_len, seq_pad, t_chunk, b_blk, unroll):
    """One (batch-block, time-chunk) grid step of the Encoder forward.

    Ref shapes (padded, lane/sublane aligned):
      x_ref      : (t_chunk*b_blk, I)   current time-chunk, time-major flattened
      wih_ref    : (I, 4*Hp)            W_ih^T, each gate padded H -> Hp
      whh_ref    : (Hp, 4*Hp)           W_hh^T, per-gate padded
      b_ref      : (1, 4*Hp)            b_ih + b_hh (f32)
      wheads_ref : (Hp, 2*Lp)           [fc_mu.weight^T | fc_logvar.weight^T]
      bheads_ref : (1, 2*Lp)
      heads_ref  : (b_blk, 2*Lp)        lane-dense fused mu|logvar output
      hidden_ref : (b_blk, Hp)          last hidden state output
      gx_scr     : (t_chunk*b_blk, 4*Hp) per-chunk input projection scratch
      h_scr/c_scr: (b_blk, Hp)          f32 recurrent state, persists over grid
    """
    Hp = whh_ref.shape[0]
    mm_dtype = whh_ref.dtype     # f32 or bf16 (MXU operands only)
    t_idx = pl.program_id(1)

    @pl.when(t_idx == 0)
    def _():
        h_scr[...] = jnp.zeros_like(h_scr)
        c_scr[...] = jnp.zeros_like(c_scr)

    # ---- Phase 1: input projection for this chunk, one matmul, bias folded.
    gx_scr[...] = (
        jnp.dot(x_ref[...], wih_ref[...], preferred_element_type=jnp.float32)
        + b_ref[...]).astype(gx_scr.dtype)

    base_t = t_idx * t_chunk

    # ---- Phase 2: serial recurrence over the chunk; only h @ W_hh^T per step.
    def step(i, carry):
        h, c = carry
        start = pl.multiple_of(i * b_blk, b_blk)
        gates = (gx_scr[pl.ds(start, b_blk), :].astype(jnp.float32)
                 + jnp.dot(h.astype(mm_dtype), whh_ref[...],
                           preferred_element_type=jnp.float32))
        # PyTorch gate order [i, f, g, o]; each gate block is 128-lane aligned
        # so these slices are free views.  Elementwise math stays f32.
        i_g = jax.nn.sigmoid(gates[:, 0 * Hp:1 * Hp])
        f_g = jax.nn.sigmoid(gates[:, 1 * Hp:2 * Hp])
        g_g = jnp.tanh(gates[:, 2 * Hp:3 * Hp])
        o_g = jax.nn.sigmoid(gates[:, 3 * Hp:4 * Hp])
        c_new = f_g * c + i_g * g_g
        h_new = o_g * jnp.tanh(c_new)
        if seq_pad != seq_len:
            # Mask padded time steps (beyond the real sequence length).
            valid = (base_t + i) < seq_len
            h_new = jnp.where(valid, h_new, h)
            c_new = jnp.where(valid, c_new, c)
        return h_new, c_new

    h_last, c_last = lax.fori_loop(0, t_chunk, step,
                                   (h_scr[...], c_scr[...]), unroll=unroll)
    h_scr[...] = h_last
    c_scr[...] = c_last

    # ---- Phase 3 (last chunk only): fused linear heads + last hidden state.
    @pl.when(t_idx == pl.num_programs(1) - 1)
    def _():
        heads_ref[...] = (
            jnp.dot(h_last.astype(mm_dtype), wheads_ref[...],
                    preferred_element_type=jnp.float32)
            + bheads_ref[...])
        hidden_ref[...] = h_last


def encoder_forward(x, params, *, matmul_dtype=jnp.float32,
                    t_chunk=None, max_b_block=64):
    """x: (batch, seq_len, input_size) f32 -> (mu, logvar, hidden_last).

    matmul_dtype=jnp.bfloat16 casts MXU operands only (safe on v5e/v6e/v7x);
    accumulation and all gate/elementwise math stay f32.
    """
    B, S, I = x.shape
    w_ih = params["w_ih"]          # (4H, I)  PyTorch layout
    w_hh = params["w_hh"]          # (4H, H)
    b_ih = params["b_ih"]          # (4H,)
    b_hh = params["b_hh"]          # (4H,)
    w_mu = params["w_mu"]          # (L, H)
    b_mu = params["b_mu"]          # (L,)
    w_lv = params["w_lv"]          # (L, H)
    b_lv = params["b_lv"]          # (L,)
    H = w_hh.shape[1]
    L = w_mu.shape[0]

    Hp = _round_up(H, 128)         # lane multiple (per gate)
    Lp = _round_up(L, 128)         # lane multiple (per head)

    # Batch blocking: keep all rows in one block when small (recurrence is
    # serial across blocks on one core); split only for large batches so v7x
    # megacore can shard the "parallel" axis across its two TensorCores.
    B8 = _round_up(B, 8)
    b_blk = B8 if B8 <= max_b_block else max_b_block
    Bp = _round_up(B8, b_blk)
    n_b = Bp // b_blk

    # Time chunking bounds VMEM independent of S.
    if t_chunk is None:
        t_chunk = min(S, 16)
    t_chunk = max(1, min(t_chunk, S))
    S_pad = _round_up(S, t_chunk)
    n_t = S_pad // t_chunk
    unroll = min(t_chunk, 8)

    gx_dtype = jnp.float32 if matmul_dtype == jnp.float32 else jnp.bfloat16

    # -------- layout prep (plain XLA glue) ---------------------------------
    # TODO(synk): cache the padded/transposed weights across calls when the
    # encoder is applied repeatedly with fixed parameters.
    # x: (B,S,I) -> time-major, pad batch->Bp and time->S_pad, then group by
    # batch block: (n_b, S_pad*b_blk, I) so each grid step reads a contiguous
    # lane-dense (t_chunk*b_blk, I) slab.
    x_sbi = jnp.transpose(x, (1, 0, 2))                              # (S,B,I)
    x_pad = jnp.pad(x_sbi, ((0, S_pad - S), (0, Bp - B), (0, 0)))    # (S_pad,Bp,I)
    x_arr = (x_pad.reshape(S_pad, n_b, b_blk, I)
             .transpose(1, 0, 2, 3)
             .reshape(n_b, S_pad * b_blk, I)
             .astype(matmul_dtype))

    # LSTM weights: pad EACH gate block H -> Hp so every gate starts on a
    # 128-lane boundary (zero padding keeps padded hidden lanes exactly zero).
    wih_g = jnp.pad(w_ih.reshape(4, H, I), ((0, 0), (0, Hp - H), (0, 0)))
    wih_t = jnp.transpose(wih_g, (2, 0, 1)).reshape(I, 4 * Hp).astype(matmul_dtype)

    whh_g = jnp.pad(w_hh.reshape(4, H, H), ((0, 0), (0, Hp - H), (0, Hp - H)))
    whh_t = jnp.transpose(whh_g, (2, 0, 1)).reshape(Hp, 4 * Hp).astype(matmul_dtype)

    b_all = jnp.pad((b_ih + b_hh).reshape(4, H), ((0, 0), (0, Hp - H)))
    b_all = b_all.reshape(1, 4 * Hp).astype(jnp.float32)

    # Fused linear heads: [mu | logvar] in one (Hp, 2*Lp) RHS.
    wmu_t = jnp.pad(w_mu.T, ((0, Hp - H), (0, Lp - L)))
    wlv_t = jnp.pad(w_lv.T, ((0, Hp - H), (0, Lp - L)))
    wheads = jnp.concatenate([wmu_t, wlv_t], axis=1).astype(matmul_dtype)
    bheads = jnp.concatenate([jnp.pad(b_mu, (0, Lp - L)),
                              jnp.pad(b_lv, (0, Lp - L))]).reshape(1, 2 * Lp)
    bheads = bheads.astype(jnp.float32)

    # -------- VMEM budget (actual buffers + slack) --------------------------
    vmem_bytes = (
        2 * _nbytes((t_chunk * b_blk, I), matmul_dtype)      # x chunk, 2 bufs
        + 2 * _nbytes((I, 4 * Hp), matmul_dtype)
        + 2 * _nbytes((Hp, 4 * Hp), matmul_dtype)
        + 2 * _nbytes((1, 4 * Hp), jnp.float32)
        + 2 * _nbytes((Hp, 2 * Lp), matmul_dtype)
        + 2 * _nbytes((1, 2 * Lp), jnp.float32)
        + 2 * _nbytes((b_blk, 2 * Lp), jnp.float32)
        + 2 * _nbytes((b_blk, Hp), jnp.float32)
        + _nbytes((t_chunk * b_blk, 4 * Hp), gx_dtype)
        + 2 * _nbytes((b_blk, Hp), jnp.float32))
    vmem_limit = min(int(vmem_bytes * 1.5) + (4 << 20), 100 << 20)

    kernel = functools.partial(
        encoder_kernel, seq_len=S, seq_pad=S_pad,
        t_chunk=t_chunk, b_blk=b_blk, unroll=unroll)

    const = lambda b, t: (0, 0)
    grid_spec = pltpu.PrefetchScalarGridSpec(
        num_scalar_prefetch=0,
        grid=(n_b, n_t),
        in_specs=[
            pl.BlockSpec((None, t_chunk * b_blk, I), lambda b, t: (b, t, 0)),
            pl.BlockSpec((I, 4 * Hp), const),
            pl.BlockSpec((Hp, 4 * Hp), const),
            pl.BlockSpec((1, 4 * Hp), const),
            pl.BlockSpec((Hp, 2 * Lp), const),
            pl.BlockSpec((1, 2 * Lp), const),
        ],
        out_specs=[
            pl.BlockSpec((b_blk, 2 * Lp), lambda b, t: (b, 0)),
            pl.BlockSpec((b_blk, Hp), lambda b, t: (b, 0)),
        ],
        scratch_shapes=[
            pltpu.VMEM((t_chunk * b_blk, 4 * Hp), gx_dtype),
            pltpu.VMEM((b_blk, Hp), jnp.float32),
            pltpu.VMEM((b_blk, Hp), jnp.float32),
        ])

    heads_p, hidden_p = pl.pallas_call(
        kernel,
        out_shape=(
            jax.ShapeDtypeStruct((Bp, 2 * Lp), jnp.float32),
            jax.ShapeDtypeStruct((Bp, Hp), jnp.float32),
        ),
        grid_spec=grid_spec,
        compiler_params=pltpu.CompilerParams(
            dimension_semantics=("parallel", "arbitrary"),
            vmem_limit_bytes=vmem_limit),
    )(x_arr, wih_t, whh_t, b_all, wheads, bheads)

    # Strip padding / split the fused head slab.
    mu = heads_p[:B, :L]
    logvar = heads_p[:B, Lp:Lp + L]
    hidden_last = hidden_p[:B, :H]
    return mu, logvar, hidden_last


def encoder_reference(x, params):
    """Pure-JAX f32 reference (mirrors PyTorch nn.LSTM + nn.Linear semantics)."""
    w_ih, w_hh = params["w_ih"], params["w_hh"]
    b_ih, b_hh = params["b_ih"], params["b_hh"]
    H = w_hh.shape[1]
    B = x.shape[0]

    def step(carry, x_t):
        h, c = carry
        gates = x_t @ w_ih.T + b_ih + h @ w_hh.T + b_hh
        i = jax.nn.sigmoid(gates[:, 0 * H:1 * H])
        f = jax.nn.sigmoid(gates[:, 1 * H:2 * H])
        g = jnp.tanh(gates[:, 2 * H:3 * H])
        o = jax.nn.sigmoid(gates[:, 3 * H:4 * H])
        c_new = f * c + i * g
        h_new = o * jnp.tanh(c_new)
        return (h_new, c_new), None

    h0 = jnp.zeros((B, H), jnp.float32)
    c0 = jnp.zeros((B, H), jnp.float32)
    (h_last, _), _ = lax.scan(step, (h0, c0), jnp.transpose(x, (1, 0, 2)))
    mu = h_last @ params["w_mu"].T + params["b_mu"]
    logvar = h_last @ params["w_lv"].T + params["b_lv"]
    return mu, logvar, h_last


def init_params(key, input_size, hidden_size, latent_dim):
    ks = jax.random.split(key, 8)
    scale = 1.0 / jnp.sqrt(hidden_size)
    u = lambda k, shape: jax.random.uniform(k, shape, jnp.float32, -scale, scale)
    return {
        "w_ih": u(ks[0], (4 * hidden_size, input_size)),
        "w_hh": u(ks[1], (4 * hidden_size, hidden_size)),
        "b_ih": u(ks[2], (4 * hidden_size,)),
        "b_hh": u(ks[3], (4 * hidden_size,)),
        "w_mu": u(ks[4], (latent_dim, hidden_size)),
        "b_mu": u(ks[5], (latent_dim,)),
        "w_lv": u(ks[6], (latent_dim, hidden_size)),
        "b_lv": u(ks[7], (latent_dim,)),
    }


if __name__ == "__main__":
    batch, seq_len, input_size, hidden_size, latent_dim = 4, 8, 16, 32, 8

    key = jax.random.PRNGKey(0)
    k_x, k_p = jax.random.split(key)
    x = jax.random.normal(k_x, (batch, seq_len, input_size), jnp.float32)
    params = init_params(k_p, input_size, hidden_size, latent_dim)

    mu_ref, logvar_ref, hidden_ref = encoder_reference(x, params)

    # f32 MXU operands (exact path), single time chunk.
    mu, logvar, hidden_last = jax.block_until_ready(encoder_forward(x, params))
    assert jnp.allclose(mu, mu_ref, atol=1e-5, rtol=1e-5)
    assert jnp.allclose(logvar, logvar_ref, atol=1e-5, rtol=1e-5)
    assert jnp.allclose(hidden_last, hidden_ref, atol=1e-5, rtol=1e-5)

    # Multi-chunk path (t_chunk=4 -> 2 chunks + bounded unroll), still exact f32.
    mu_c, logvar_c, hidden_c = jax.block_until_ready(
        encoder_forward(x, params, t_chunk=4))
    assert jnp.allclose(mu_c, mu_ref, atol=1e-5, rtol=1e-5)
    assert jnp.allclose(logvar_c, logvar_ref, atol=1e-5, rtol=1e-5)
    assert jnp.allclose(hidden_c, hidden_ref, atol=1e-5, rtol=1e-5)

    # Ragged time chunking (t_chunk=3 -> padded last chunk is masked out).
    mu_r, logvar_r, hidden_r = jax.block_until_ready(
        encoder_forward(x, params, t_chunk=3))
    assert jnp.allclose(mu_r, mu_ref, atol=1e-5, rtol=1e-5)
    assert jnp.allclose(logvar_r, logvar_ref, atol=1e-5, rtol=1e-5)
    assert jnp.allclose(hidden_r, hidden_ref, atol=1e-5, rtol=1e-5)

    # bf16 MXU operands (fast path on all generations); f32 accumulation +
    # f32 gate math.
    mu_b, logvar_b, hidden_b = jax.block_until_ready(
        encoder_forward(x, params, matmul_dtype=jnp.bfloat16))
    assert jnp.allclose(mu_b, mu_ref, atol=5e-2, rtol=5e-2)
    assert jnp.allclose(logvar_b, logvar_ref, atol=5e-2, rtol=5e-2)
    assert jnp.allclose(hidden_b, hidden_ref, atol=5e-2, rtol=5e-2)

    print("KERNEL_OK")
</pallas_src>

<mosaic_0001>
module attributes {stable_mosaic.version = 11 : i64} {
  func.func @encoder_kernel(%arg0: i32, %arg1: i32, %arg2: memref<1x64x16xf32, #tpu.memory_space<vmem>>, %arg3: memref<16x512xf32, #tpu.memory_space<vmem>>, %arg4: memref<128x512xf32, #tpu.memory_space<vmem>>, %arg5: memref<1x512xf32, #tpu.memory_space<vmem>>, %arg6: memref<128x256xf32, #tpu.memory_space<vmem>>, %arg7: memref<1x256xf32, #tpu.memory_space<vmem>>, %arg8: memref<8x256xf32, #tpu.memory_space<vmem>>, %arg9: memref<8x128xf32, #tpu.memory_space<vmem>>, %arg10: memref<64x512xf32, #tpu.memory_space<vmem>>, %arg11: memref<8x128xf32, #tpu.memory_space<vmem>>, %arg12: memref<8x128xf32, #tpu.memory_space<vmem>>) attributes {dimension_semantics = [#tpu.dimension_semantics<parallel>, #tpu.dimension_semantics<arbitrary>], iteration_bounds = array<i64: 1, 1>, scalar_prefetch = 0 : i64, scratch_operands = 3 : i64, tpu.core_type = #tpu.core_type<tc>, window_params = [{transform_indices = @transform_0, window_bounds = array<i64: 1, 64, 16>}, {pipeline_mode = #tpu.pipeline_mode<synchronous>, transform_indices = @transform_1, window_bounds = array<i64: 16, 512>}, {pipeline_mode = #tpu.pipeline_mode<synchronous>, transform_indices = @transform_2, window_bounds = array<i64: 128, 512>}, {pipeline_mode = #tpu.pipeline_mode<synchronous>, transform_indices = @transform_3, window_bounds = array<i64: 1, 512>}, {pipeline_mode = #tpu.pipeline_mode<synchronous>, transform_indices = @transform_4, window_bounds = array<i64: 128, 256>}, {pipeline_mode = #tpu.pipeline_mode<synchronous>, transform_indices = @transform_5, window_bounds = array<i64: 1, 256>}, {transform_indices = @transform_6, window_bounds = array<i64: 8, 256>}, {transform_indices = @transform_7, window_bounds = array<i64: 8, 128>}]} {
    %c0_i32 = arith.constant 0 : i32
    %0 = arith.cmpi eq, %arg1, %c0_i32 : i32
    %1 = arith.extui %0 : i1 to i32
    %c0_i32_0 = arith.constant 0 : i32
    %2 = arith.cmpi ne, %1, %c0_i32_0 : i32
    scf.if %2 {
      %cst_84 = arith.constant 0.000000e+00 : f32
      %274 = vector.broadcast %cst_84 : f32 to vector<8x128xf32>
      %c0_85 = arith.constant 0 : index
      %c0_86 = arith.constant 0 : index
      %275 = vector.load %arg11[%c0_85, %c0_86] : memref<8x128xf32, #tpu.memory_space<vmem>>, vector<8x128xf32>
      tpu.vector_store %arg11[%c0_85, %c0_86], %274 {strides = array<i32>} : memref<8x128xf32, #tpu.memory_space<vmem>>, vector<8x128xf32>,
      %cst_87 = arith.constant 0.000000e+00 : f32
      %276 = vector.broadcast %cst_87 : f32 to vector<8x128xf32>
      %c0_88 = arith.constant 0 : index
      %c0_89 = arith.constant 0 : index
      %277 = vector.load %arg12[%c0_88, %c0_89] : memref<8x128xf32, #tpu.memory_space<vmem>>, vector<8x128xf32>
      tpu.vector_store %arg12[%c0_88, %c0_89], %276 {strides = array<i32>} : memref<8x128xf32, #tpu.memory_space<vmem>>, vector<8x128xf32>,
    } else {
    }
    %c0 = arith.constant 0 : index
    %c0_1 = arith.constant 0 : index
    %c0_2 = arith.constant 0 : index
    %3 = vector.load %arg2[%c0, %c0_1, %c0_2] : memref<1x64x16xf32, #tpu.memory_space<vmem>>, vector<1x64x16xf32>
    %4 = vector.shape_cast %3 : vector<1x64x16xf32> to vector<64x16xf32>
    %c0_3 = arith.constant 0 : index
    %c0_4 = arith.constant 0 : index
    %5 = vector.load %arg3[%c0_3, %c0_4] : memref<16x512xf32, #tpu.memory_space<vmem>>, vector<16x512xf32>
    %cst = arith.constant dense<0.000000e+00> : vector<64x512xf32>
    %6 = tpu.matmul %4, %5, %cst {dimension_numbers = #tpu.dot_dimension_numbers<[1], [0], [0], [1], [0, 0, 1, 1], [], []>} : vector<64x16xf32>, vector<16x512xf32>, vector<64x512xf32> -> vector<64x512xf32>
    %c0_5 = arith.constant 0 : index
    %c0_6 = arith.constant 0 : index
    %7 = vector.load %arg5[%c0_5, %c0_6] : memref<1x512xf32, #tpu.memory_space<vmem>>, vector<1x512xf32>
    %8 = vector.broadcast %7 : vector<1x512xf32> to vector<64x512xf32>
    %9 = arith.addf %6, %8 : vector<64x512xf32>
    %c0_7 = arith.constant 0 : index
    %c0_8 = arith.constant 0 : index
    %10 = vector.load %arg10[%c0_7, %c0_8] : memref<64x512xf32, #tpu.memory_space<vmem>>, vector<64x512xf32>
    tpu.vector_store %arg10[%c0_7, %c0_8], %9 {strides = array<i32>} : memref<64x512xf32, #tpu.memory_space<vmem>>, vector<64x512xf32>,
    %c0_9 = arith.constant 0 : index
    %c0_10 = arith.constant 0 : index
    %11 = vector.load %arg11[%c0_9, %c0_10] : memref<8x128xf32, #tpu.memory_space<vmem>>, vector<8x128xf32>
    %c0_11 = arith.constant 0 : index
    %c0_12 = arith.constant 0 : index
    %12 = vector.load %arg12[%c0_11, %c0_12] : memref<8x128xf32, #tpu.memory_space<vmem>>, vector<8x128xf32>
    %c0_i32_13 = arith.constant 0 : i32
    %c8_i32 = arith.constant 8 : i32
    %13 = arith.muli %c0_i32_13, %c8_i32 : i32
    %14 = tpu.assume_multiple %13, 8 : i32
    %15 = arith.index_cast %14 : i32 to index
    %c0_14 = arith.constant 0 : index
    %16 = vector.load %arg10[%15, %c0_14] : memref<64x512xf32, #tpu.memory_space<vmem>>, vector<8x512xf32>
    %c0_15 = arith.constant 0 : index
    %c0_16 = arith.constant 0 : index
    %17 = vector.load %arg4[%c0_15, %c0_16] : memref<128x512xf32, #tpu.memory_space<vmem>>, vector<128x512xf32>
    %cst_17 = arith.constant dense<0.000000e+00> : vector<8x512xf32>
    %18 = tpu.matmul %11, %17, %cst_17 {dimension_numbers = #tpu.dot_dimension_numbers<[1], [0], [0], [1], [0, 0, 1, 1], [], []>} : vector<8x128xf32>, vector<128x512xf32>, vector<8x512xf32> -> vector<8x512xf32>
    %19 = arith.addf %16, %18 : vector<8x512xf32>
    %20 = vector.extract_strided_slice %19 {offsets = [0, 0], sizes = [8, 128], strides = [1, 1]} : vector<8x512xf32> to vector<8x128xf32>
    %21 = arith.negf %20 : vector<8x128xf32>
    %22 = math.exp %21 : vector<8x128xf32>
    %cst_18 = arith.constant 1.000000e+00 : f32
    %23 = vector.broadcast %cst_18 : f32 to vector<8x128xf32>
    %24 = arith.addf %23, %22 : vector<8x128xf32>
    %25 = arith.divf %23, %24 : vector<8x128xf32>
    %26 = vector.extract_strided_slice %19 {offsets = [0, 128], sizes = [8, 128], strides = [1, 1]} : vector<8x512xf32> to vector<8x128xf32>
    %27 = arith.negf %26 : vector<8x128xf32>
    %28 = math.exp %27 : vector<8x128xf32>
    %cst_19 = arith.constant 1.000000e+00 : f32
    %29 = vector.broadcast %cst_19 : f32 to vector<8x128xf32>
    %30 = arith.addf %29, %28 : vector<8x128xf32>
    %31 = arith.divf %29, %30 : vector<8x128xf32>
    %32 = vector.extract_strided_slice %19 {offsets = [0, 256], sizes = [8, 128], strides = [1, 1]} : vector<8x512xf32> to vector<8x128xf32>
    %33 = math.tanh %32 : vector<8x128xf32>
    %34 = vector.extract_strided_slice %19 {offsets = [0, 384], sizes = [8, 128], strides = [1, 1]} : vector<8x512xf32> to vector<8x128xf32>
    %35 = arith.negf %34 : vector<8x128xf32>
    %36 = math.exp %35 : vector<8x128xf32>
    %cst_20 = arith.constant 1.000000e+00 : f32
    %37 = vector.broadcast %cst_20 : f32 to vector<8x128xf32>
    %38 = arith.addf %37, %36 : vector<8x128xf32>
    %39 = arith.divf %37, %38 : vector<8x128xf32>
    %40 = arith.mulf %31, %12 : vector<8x128xf32>
    %41 = arith.mulf %25, %33 : vector<8x128xf32>
    %42 = arith.addf %40, %41 : vector<8x128xf32>
    %43 = math.tanh %42 : vector<8x128xf32>
    %44 = arith.mulf %39, %43 : vector<8x128xf32>
    %c1_i32 = arith.constant 1 : i32
    %c8_i32_21 = arith.constant 8 : i32
    %45 = arith.muli %c1_i32, %c8_i32_21 : i32
    %46 = tpu.assume_multiple %45, 8 : i32
    %47 = arith.index_cast %46 : i32 to index
    %c0_22 = arith.constant 0 : index
    %48 = vector.load %arg10[%47, %c0_22] : memref<64x512xf32, #tpu.memory_space<vmem>>, vector<8x512xf32>
    %c0_23 = arith.constant 0 : index
    %c0_24 = arith.constant 0 : index
    %49 = vector.load %arg4[%c0_23, %c0_24] : memref<128x512xf32, #tpu.memory_space<vmem>>, vector<128x512xf32>
    %cst_25 = arith.constant dense<0.000000e+00> : vector<8x512xf32>
    %50 = tpu.matmul %44, %49, %cst_25 {dimension_numbers = #tpu.dot_dimension_numbers<[1], [0], [0], [1], [0, 0, 1, 1], [], []>} : vector<8x128xf32>, vector<128x512xf32>, vector<8x512xf32> -> vector<8x512xf32>
    %51 = arith.addf %48, %50 : vector<8x512xf32>
    %52 = vector.extract_strided_slice %51 {offsets = [0, 0], sizes = [8, 128], strides = [1, 1]} : vector<8x512xf32> to vector<8x128xf32>
    %53 = arith.negf %52 : vector<8x128xf32>
    %54 = math.exp %53 : vector<8x128xf32>
    %cst_26 = arith.constant 1.000000e+00 : f32
    %55 = vector.broadcast %cst_26 : f32 to vector<8x128xf32>
    %56 = arith.addf %55, %54 : vector<8x128xf32>
    %57 = arith.divf %55, %56 : vector<8x128xf32>
    %58 = vector.extract_strided_slice %51 {offsets = [0, 128], sizes = [8, 128], strides = [1, 1]} : vector<8x512xf32> to vector<8x128xf32>
    %59 = arith.negf %58 : vector<8x128xf32>
    %60 = math.exp %59 : vector<8x128xf32>
    %cst_27 = arith.constant 1.000000e+00 : f32
    %61 = vector.broadcast %cst_27 : f32 to vector<8x128xf32>
    %62 = arith.addf %61, %60 : vector<8x128xf32>
    %63 = arith.divf %61, %62 : vector<8x128xf32>
    %64 = vector.extract_strided_slice %51 {offsets = [0, 256], sizes = [8, 128], strides = [1, 1]} : vector<8x512xf32> to vector<8x128xf32>
    %65 = math.tanh %64 : vector<8x128xf32>
    %66 = vector.extract_strided_slice %51 {offsets = [0, 384], sizes = [8, 128], strides = [1, 1]} : vector<8x512xf32> to vector<8x128xf32>
    %67 = arith.negf %66 : vector<8x128xf32>
    %68 = math.exp %67 : vector<8x128xf32>
    %cst_28 = arith.constant 1.000000e+00 : f32
    %69 = vector.broadcast %cst_28 : f32 to vector<8x128xf32>
    %70 = arith.addf %69, %68 : vector<8x128xf32>
    %71 = arith.divf %69, %70 : vector<8x128xf32>
    %72 = arith.mulf %63, %42 : vector<8x128xf32>
    %73 = arith.mulf %57, %65 : vector<8x128xf32>
    %74 = arith.addf %72, %73 : vector<8x128xf32>
    %75 = math.tanh %74 : vector<8x128xf32>
    %76 = arith.mulf %71, %75 : vector<8x128xf32>
    %c2_i32 = arith.constant 2 : i32
    %c8_i32_29 = arith.constant 8 : i32
    %77 = arith.muli %c2_i32, %c8_i32_29 : i32
    %78 = tpu.assume_multiple %77, 8 : i32
    %79 = arith.index_cast %78 : i32 to index
    %c0_30 = arith.constant 0 : index
    %80 = vector.load %arg10[%79, %c0_30] : memref<64x512xf32, #tpu.memory_space<vmem>>, vector<8x512xf32>
    %c0_31 = arith.constant 0 : index
    %c0_32 = arith.constant 0 : index
    %81 = vector.load %arg4[%c0_31, %c0_32] : memref<128x512xf32, #tpu.memory_space<vmem>>, vector<128x512xf32>
    %cst_33 = arith.constant dense<0.000000e+00> : vector<8x512xf32>
    %82 = tpu.matmul %76, %81, %cst_33 {dimension_numbers = #tpu.dot_dimension_numbers<[1], [0], [0], [1], [0, 0, 1, 1], [], []>} : vector<8x128xf32>, vector<128x512xf32>, vector<8x512xf32> -> vector<8x512xf32>
    %83 = arith.addf %80, %82 : vector<8x512xf32>
    %84 = vector.extract_strided_slice %83 {offsets = [0, 0], sizes = [8, 128], strides = [1, 1]} : vector<8x512xf32> to vector<8x128xf32>
    %85 = arith.negf %84 : vector<8x128xf32>
    %86 = math.exp %85 : vector<8x128xf32>
    %cst_34 = arith.constant 1.000000e+00 : f32
    %87 = vector.broadcast %cst_34 : f32 to vector<8x128xf32>
    %88 = arith.addf %87, %86 : vector<8x128xf32>
    %89 = arith.divf %87, %88 : vector<8x128xf32>
    %90 = vector.extract_strided_slice %83 {offsets = [0, 128], sizes = [8, 128], strides = [1, 1]} : vector<8x512xf32> to vector<8x128xf32>
    %91 = arith.negf %90 : vector<8x128xf32>
    %92 = math.exp %91 : vector<8x128xf32>
    %cst_35 = arith.constant 1.000000e+00 : f32
    %93 = vector.broadcast %cst_35 : f32 to vector<8x128xf32>
    %94 = arith.addf %93, %92 : vector<8x128xf32>
    %95 = arith.divf %93, %94 : vector<8x128xf32>
    %96 = vector.extract_strided_slice %83 {offsets = [0, 256], sizes = [8, 128], strides = [1, 1]} : vector<8x512xf32> to vector<8x128xf32>
    %97 = math.tanh %96 : vector<8x128xf32>
    %98 = vector.extract_strided_slice %83 {offsets = [0, 384], sizes = [8, 128], strides = [1, 1]} : vector<8x512xf32> to vector<8x128xf32>
    %99 = arith.negf %98 : vector<8x128xf32>
    %100 = math.exp %99 : vector<8x128xf32>
    %cst_36 = arith.constant 1.000000e+00 : f32
    %101 = vector.broadcast %cst_36 : f32 to vector<8x128xf32>
    %102 = arith.addf %101, %100 : vector<8x128xf32>
    %103 = arith.divf %101, %102 : vector<8x128xf32>
    %104 = arith.mulf %95, %74 : vector<8x128xf32>
    %105 = arith.mulf %89, %97 : vector<8x128xf32>
    %106 = arith.addf %104, %105 : vector<8x128xf32>
    %107 = math.tanh %106 : vector<8x128xf32>
    %108 = arith.mulf %103, %107 : vector<8x128xf32>
    %c3_i32 = arith.constant 3 : i32
    %c8_i32_37 = arith.constant 8 : i32
    %109 = arith.muli %c3_i32, %c8_i32_37 : i32
    %110 = tpu.assume_multiple %109, 8 : i32
    %111 = arith.index_cast %110 : i32 to index
    %c0_38 = arith.constant 0 : index
    %112 = vector.load %arg10[%111, %c0_38] : memref<64x512xf32, #tpu.memory_space<vmem>>, vector<8x512xf32>
    %c0_39 = arith.constant 0 : index
    %c0_40 = arith.constant 0 : index
    %113 = vector.load %arg4[%c0_39, %c0_40] : memref<128x512xf32, #tpu.memory_space<vmem>>, vector<128x512xf32>
    %cst_41 = arith.constant dense<0.000000e+00> : vector<8x512xf32>
    %114 = tpu.matmul %108, %113, %cst_41 {dimension_numbers = #tpu.dot_dimension_numbers<[1], [0], [0], [1], [0, 0, 1, 1], [], []>} : vector<8x128xf32>, vector<128x512xf32>, vector<8x512xf32> -> vector<8x512xf32>
    %115 = arith.addf %112, %114 : vector<8x512xf32>
    %116 = vector.extract_strided_slice %115 {offsets = [0, 0], sizes = [8, 128], strides = [1, 1]} : vector<8x512xf32> to vector<8x128xf32>
    %117 = arith.negf %116 : vector<8x128xf32>
    %118 = math.exp %117 : vector<8x128xf32>
    %cst_42 = arith.constant 1.000000e+00 : f32
    %119 = vector.broadcast %cst_42 : f32 to vector<8x128xf32>
    %120 = arith.addf %119, %118 : vector<8x128xf32>
    %121 = arith.divf %119, %120 : vector<8x128xf32>
    %122 = vector.extract_strided_slice %115 {offsets = [0, 128], sizes = [8, 128], strides = [1, 1]} : vector<8x512xf32> to vector<8x128xf32>
    %123 = arith.negf %122 : vector<8x128xf32>
    %124 = math.exp %123 : vector<8x128xf32>
    %cst_43 = arith.constant 1.000000e+00 : f32
    %125 = vector.broadcast %cst_43 : f32 to vector<8x128xf32>
    %126 = arith.addf %125, %124 : vector<8x128xf32>
    %127 = arith.divf %125, %126 : vector<8x128xf32>
    %128 = vector.extract_strided_slice %115 {offsets = [0, 256], sizes = [8, 128], strides = [1, 1]} : vector<8x512xf32> to vector<8x128xf32>
    %129 = math.tanh %128 : vector<8x128xf32>
    %130 = vector.extract_strided_slice %115 {offsets = [0, 384], sizes = [8, 128], strides = [1, 1]} : vector<8x512xf32> to vector<8x128xf32>
    %131 = arith.negf %130 : vector<8x128xf32>
    %132 = math.exp %131 : vector<8x128xf32>
    %cst_44 = arith.constant 1.000000e+00 : f32
    %133 = vector.broadcast %cst_44 : f32 to vector<8x128xf32>
    %134 = arith.addf %133, %132 : vector<8x128xf32>
    %135 = arith.divf %133, %134 : vector<8x128xf32>
    %136 = arith.mulf %127, %106 : vector<8x128xf32>
    %137 = arith.mulf %121, %129 : vector<8x128xf32>
    %138 = arith.addf %136, %137 : vector<8x128xf32>
    %139 = math.tanh %138 : vector<8x128xf32>
    %140 = arith.mulf %135, %139 : vector<8x128xf32>
    %c4_i32 = arith.constant 4 : i32
    %c8_i32_45 = arith.constant 8 : i32
    %141 = arith.muli %c4_i32, %c8_i32_45 : i32
    %142 = tpu.assume_multiple %141, 8 : i32
    %143 = arith.index_cast %142 : i32 to index
    %c0_46 = arith.constant 0 : index
    %144 = vector.load %arg10[%143, %c0_46] : memref<64x512xf32, #tpu.memory_space<vmem>>, vector<8x512xf32>
    %c0_47 = arith.constant 0 : index
    %c0_48 = arith.constant 0 : index
    %145 = vector.load %arg4[%c0_47, %c0_48] : memref<128x512xf32, #tpu.memory_space<vmem>>, vector<128x512xf32>
    %cst_49 = arith.constant dense<0.000000e+00> : vector<8x512xf32>
    %146 = tpu.matmul %140, %145, %cst_49 {dimension_numbers = #tpu.dot_dimension_numbers<[1], [0], [0], [1], [0, 0, 1, 1], [], []>} : vector<8x128xf32>, vector<128x512xf32>, vector<8x512xf32> -> vector<8x512xf32>
    %147 = arith.addf %144, %146 : vector<8x512xf32>
    %148 = vector.extract_strided_slice %147 {offsets = [0, 0], sizes = [8, 128], strides = [1, 1]} : vector<8x512xf32> to vector<8x128xf32>
    %149 = arith.negf %148 : vector<8x128xf32>
    %150 = math.exp %149 : vector<8x128xf32>
    %cst_50 = arith.constant 1.000000e+00 : f32
    %151 = vector.broadcast %cst_50 : f32 to vector<8x128xf32>
    %152 = arith.addf %151, %150 : vector<8x128xf32>
    %153 = arith.divf %151, %152 : vector<8x128xf32>
    %154 = vector.extract_strided_slice %147 {offsets = [0, 128], sizes = [8, 128], strides = [1, 1]} : vector<8x512xf32> to vector<8x128xf32>
    %155 = arith.negf %154 : vector<8x128xf32>
    %156 = math.exp %155 : vector<8x128xf32>
    %cst_51 = arith.constant 1.000000e+00 : f32
    %157 = vector.broadcast %cst_51 : f32 to vector<8x128xf32>
    %158 = arith.addf %157, %156 : vector<8x128xf32>
    %159 = arith.divf %157, %158 : vector<8x128xf32>
    %160 = vector.extract_strided_slice %147 {offsets = [0, 256], sizes = [8, 128], strides = [1, 1]} : vector<8x512xf32> to vector<8x128xf32>
    %161 = math.tanh %160 : vector<8x128xf32>
    %162 = vector.extract_strided_slice %147 {offsets = [0, 384], sizes = [8, 128], strides = [1, 1]} : vector<8x512xf32> to vector<8x128xf32>
    %163 = arith.negf %162 : vector<8x128xf32>
    %164 = math.exp %163 : vector<8x128xf32>
    %cst_52 = arith.constant 1.000000e+00 : f32
    %165 = vector.broadcast %cst_52 : f32 to vector<8x128xf32>
    %166 = arith.addf %165, %164 : vector<8x128xf32>
    %167 = arith.divf %165, %166 : vector<8x128xf32>
    %168 = arith.mulf %159, %138 : vector<8x128xf32>
    %169 = arith.mulf %153, %161 : vector<8x128xf32>
    %170 = arith.addf %168, %169 : vector<8x128xf32>
    %171 = math.tanh %170 : vector<8x128xf32>
    %172 = arith.mulf %167, %171 : vector<8x128xf32>
    %c5_i32 = arith.constant 5 : i32
    %c8_i32_53 = arith.constant 8 : i32
    %173 = arith.muli %c5_i32, %c8_i32_53 : i32
    %174 = tpu.assume_multiple %173, 8 : i32
    %175 = arith.index_cast %174 : i32 to index
    %c0_54 = arith.constant 0 : index
    %176 = vector.load %arg10[%175, %c0_54] : memref<64x512xf32, #tpu.memory_space<vmem>>, vector<8x512xf32>
    %c0_55 = arith.constant 0 : index
    %c0_56 = arith.constant 0 : index
    %177 = vector.load %arg4[%c0_55, %c0_56] : memref<128x512xf32, #tpu.memory_space<vmem>>, vector<128x512xf32>
    %cst_57 = arith.constant dense<0.000000e+00> : vector<8x512xf32>
    %178 = tpu.matmul %172, %177, %cst_57 {dimension_numbers = #tpu.dot_dimension_numbers<[1], [0], [0], [1], [0, 0, 1, 1], [], []>} : vector<8x128xf32>, vector<128x512xf32>, vector<8x512xf32> -> vector<8x512xf32>
    %179 = arith.addf %176, %178 : vector<8x512xf32>
    %180 = vector.extract_strided_slice %179 {offsets = [0, 0], sizes = [8, 128], strides = [1, 1]} : vector<8x512xf32> to vector<8x128xf32>
    %181 = arith.negf %180 : vector<8x128xf32>
    %182 = math.exp %181 : vector<8x128xf32>
    %cst_58 = arith.constant 1.000000e+00 : f32
    %183 = vector.broadcast %cst_58 : f32 to vector<8x128xf32>
    %184 = arith.addf %183, %182 : vector<8x128xf32>
    %185 = arith.divf %183, %184 : vector<8x128xf32>
    %186 = vector.extract_strided_slice %179 {offsets = [0, 128], sizes = [8, 128], strides = [1, 1]} : vector<8x512xf32> to vector<8x128xf32>
    %187 = arith.negf %186 : vector<8x128xf32>
    %188 = math.exp %187 : vector<8x128xf32>
    %cst_59 = arith.constant 1.000000e+00 : f32
    %189 = vector.broadcast %cst_59 : f32 to vector<8x128xf32>
    %190 = arith.addf %189, %188 : vector<8x128xf32>
    %191 = arith.divf %189, %190 : vector<8x128xf32>
    %192 = vector.extract_strided_slice %179 {offsets = [0, 256], sizes = [8, 128], strides = [1, 1]} : vector<8x512xf32> to vector<8x128xf32>
    %193 = math.tanh %192 : vector<8x128xf32>
    %194 = vector.extract_strided_slice %179 {offsets = [0, 384], sizes = [8, 128], strides = [1, 1]} : vector<8x512xf32> to vector<8x128xf32>
    %195 = arith.negf %194 : vector<8x128xf32>
    %196 = math.exp %195 : vector<8x128xf32>
    %cst_60 = arith.constant 1.000000e+00 : f32
    %197 = vector.broadcast %cst_60 : f32 to vector<8x128xf32>
    %198 = arith.addf %197, %196 : vector<8x128xf32>
    %199 = arith.divf %197, %198 : vector<8x128xf32>
    %200 = arith.mulf %191, %170 : vector<8x128xf32>
    %201 = arith.mulf %185, %193 : vector<8x128xf32>
    %202 = arith.addf %200, %201 : vector<8x128xf32>
    %203 = math.tanh %202 : vector<8x128xf32>
    %204 = arith.mulf %199, %203 : vector<8x128xf32>
    %c6_i32 = arith.constant 6 : i32
    %c8_i32_61 = arith.constant 8 : i32
    %205 = arith.muli %c6_i32, %c8_i32_61 : i32
    %206 = tpu.assume_multiple %205, 8 : i32
    %207 = arith.index_cast %206 : i32 to index
    %c0_62 = arith.constant 0 : index
    %208 = vector.load %arg10[%207, %c0_62] : memref<64x512xf32, #tpu.memory_space<vmem>>, vector<8x512xf32>
    %c0_63 = arith.constant 0 : index
    %c0_64 = arith.constant 0 : index
    %209 = vector.load %arg4[%c0_63, %c0_64] : memref<128x512xf32, #tpu.memory_space<vmem>>, vector<128x512xf32>
    %cst_65 = arith.constant dense<0.000000e+00> : vector<8x512xf32>
    %210 = tpu.matmul %204, %209, %cst_65 {dimension_numbers = #tpu.dot_dimension_numbers<[1], [0], [0], [1], [0, 0, 1, 1], [], []>} : vector<8x128xf32>, vector<128x512xf32>, vector<8x512xf32> -> vector<8x512xf32>
    %211 = arith.addf %208, %210 : vector<8x512xf32>
    %212 = vector.extract_strided_slice %211 {offsets = [0, 0], sizes = [8, 128], strides = [1, 1]} : vector<8x512xf32> to vector<8x128xf32>
    %213 = arith.negf %212 : vector<8x128xf32>
    %214 = math.exp %213 : vector<8x128xf32>
    %cst_66 = arith.constant 1.000000e+00 : f32
    %215 = vector.broadcast %cst_66 : f32 to vector<8x128xf32>
    %216 = arith.addf %215, %214 : vector<8x128xf32>
    %217 = arith.divf %215, %216 : vector<8x128xf32>
    %218 = vector.extract_strided_slice %211 {offsets = [0, 128], sizes = [8, 128], strides = [1, 1]} : vector<8x512xf32> to vector<8x128xf32>
    %219 = arith.negf %218 : vector<8x128xf32>
    %220 = math.exp %219 : vector<8x128xf32>
    %cst_67 = arith.constant 1.000000e+00 : f32
    %221 = vector.broadcast %cst_67 : f32 to vector<8x128xf32>
    %222 = arith.addf %221, %220 : vector<8x128xf32>
    %223 = arith.divf %221, %222 : vector<8x128xf32>
    %224 = vector.extract_strided_slice %211 {offsets = [0, 256], sizes = [8, 128], strides = [1, 1]} : vector<8x512xf32> to vector<8x128xf32>
    %225 = math.tanh %224 : vector<8x128xf32>
    %226 = vector.extract_strided_slice %211 {offsets = [0, 384], sizes = [8, 128], strides = [1, 1]} : vector<8x512xf32> to vector<8x128xf32>
    %227 = arith.negf %226 : vector<8x128xf32>
    %228 = math.exp %227 : vector<8x128xf32>
    %cst_68 = arith.constant 1.000000e+00 : f32
    %229 = vector.broadcast %cst_68 : f32 to vector<8x128xf32>
    %230 = arith.addf %229, %228 : vector<8x128xf32>
    %231 = arith.divf %229, %230 : vector<8x128xf32>
    %232 = arith.mulf %223, %202 : vector<8x128xf32>
    %233 = arith.mulf %217, %225 : vector<8x128xf32>
    %234 = arith.addf %232, %233 : vector<8x128xf32>
    %235 = math.tanh %234 : vector<8x128xf32>
    %236 = arith.mulf %231, %235 : vector<8x128xf32>
    %c7_i32 = arith.constant 7 : i32
    %c8_i32_69 = arith.constant 8 : i32
    %237 = arith.muli %c7_i32, %c8_i32_69 : i32
    %238 = tpu.assume_multiple %237, 8 : i32
    %239 = arith.index_cast %238 : i32 to index
    %c0_70 = arith.constant 0 : index
    %240 = vector.load %arg10[%239, %c0_70] : memref<64x512xf32, #tpu.memory_space<vmem>>, vector<8x512xf32>
    %c0_71 = arith.constant 0 : index
    %c0_72 = arith.constant 0 : index
    %241 = vector.load %arg4[%c0_71, %c0_72] : memref<128x512xf32, #tpu.memory_space<vmem>>, vector<128x512xf32>
    %cst_73 = arith.constant dense<0.000000e+00> : vector<8x512xf32>
    %242 = tpu.matmul %236, %241, %cst_73 {dimension_numbers = #tpu.dot_dimension_numbers<[1], [0], [0], [1], [0, 0, 1, 1], [], []>} : vector<8x128xf32>, vector<128x512xf32>, vector<8x512xf32> -> vector<8x512xf32>
    %243 = arith.addf %240, %242 : vector<8x512xf32>
    %244 = vector.extract_strided_slice %243 {offsets = [0, 0], sizes = [8, 128], strides = [1, 1]} : vector<8x512xf32> to vector<8x128xf32>
    %245 = arith.negf %244 : vector<8x128xf32>
    %246 = math.exp %245 : vector<8x128xf32>
    %cst_74 = arith.constant 1.000000e+00 : f32
    %247 = vector.broadcast %cst_74 : f32 to vector<8x128xf32>
    %248 = arith.addf %247, %246 : vector<8x128xf32>
    %249 = arith.divf %247, %248 : vector<8x128xf32>
    %250 = vector.extract_strided_slice %243 {offsets = [0, 128], sizes = [8, 128], strides = [1, 1]} : vector<8x512xf32> to vector<8x128xf32>
    %251 = arith.negf %250 : vector<8x128xf32>
    %252 = math.exp %251 : vector<8x128xf32>
    %cst_75 = arith.constant 1.000000e+00 : f32
    %253 = vector.broadcast %cst_75 : f32 to vector<8x128xf32>
    %254 = arith.addf %253, %252 : vector<8x128xf32>
    %255 = arith.divf %253, %254 : vector<8x128xf32>
    %256 = vector.extract_strided_slice %243 {offsets = [0, 256], sizes = [8, 128], strides = [1, 1]} : vector<8x512xf32> to vector<8x128xf32>
    %257 = math.tanh %256 : vector<8x128xf32>
    %258 = vector.extract_strided_slice %243 {offsets = [0, 384], sizes = [8, 128], strides = [1, 1]} : vector<8x512xf32> to vector<8x128xf32>
    %259 = arith.negf %258 : vector<8x128xf32>
    %260 = math.exp %259 : vector<8x128xf32>
    %cst_76 = arith.constant 1.000000e+00 : f32
    %261 = vector.broadcast %cst_76 : f32 to vector<8x128xf32>
    %262 = arith.addf %261, %260 : vector<8x128xf32>
    %263 = arith.divf %261, %262 : vector<8x128xf32>
    %264 = arith.mulf %255, %234 : vector<8x128xf32>
    %265 = arith.mulf %249, %257 : vector<8x128xf32>
    %266 = arith.addf %264, %265 : vector<8x128xf32>
    %267 = math.tanh %266 : vector<8x128xf32>
    %268 = arith.mulf %263, %267 : vector<8x128xf32>
    %c8_i32_77 = arith.constant 8 : i32
    %c0_78 = arith.constant 0 : index
    %c0_79 = arith.constant 0 : index
    %269 = vector.load %arg11[%c0_78, %c0_79] : memref<8x128xf32, #tpu.memory_space<vmem>>, vector<8x128xf32>
    tpu.vector_store %arg11[%c0_78, %c0_79], %268 {strides = array<i32>} : memref<8x128xf32, #tpu.memory_space<vmem>>, vector<8x128xf32>,
    %c0_80 = arith.constant 0 : index
    %c0_81 = arith.constant 0 : index
    %270 = vector.load %arg12[%c0_80, %c0_81] : memref<8x128xf32, #tpu.memory_space<vmem>>, vector<8x128xf32>
    tpu.vector_store %arg12[%c0_80, %c0_81], %266 {strides = array<i32>} : memref<8x128xf32, #tpu.memory_space<vmem>>, vector<8x128xf32>,
    %c0_i32_82 = arith.constant 0 : i32
    %271 = arith.cmpi eq, %arg1, %c0_i32_82 : i32
    %272 = arith.extui %271 : i1 to i32
    %c0_i32_83 = arith.constant 0 : i32
    %273 = arith.cmpi ne, %272, %c0_i32_83 : i32
    scf.if %273 {
      %c0_84 = arith.constant 0 : index
      %c0_85 = arith.constant 0 : index
      %274 = vector.load %arg6[%c0_84, %c0_85] : memref<128x256xf32, #tpu.memory_space<vmem>>, vector<128x256xf32>
      %cst_86 = arith.constant dense<0.000000e+00> : vector<8x256xf32>
      %275 = tpu.matmul %268, %274, %cst_86 {dimension_numbers = #tpu.dot_dimension_numbers<[1], [0], [0], [1], [0, 0, 1, 1], [], []>} : vector<8x128xf32>, vector<128x256xf32>, vector<8x256xf32> -> vector<8x256xf32>
      %c0_87 = arith.constant 0 : index
      %c0_88 = arith.constant 0 : index
      %276 = vector.load %arg7[%c0_87, %c0_88] : memref<1x256xf32, #tpu.memory_space<vmem>>, vector<1x256xf32>
      %277 = vector.broadcast %276 : vector<1x256xf32> to vector<8x256xf32>
      %278 = arith.addf %275, %277 : vector<8x256xf32>
      %c0_89 = arith.constant 0 : index
      %c0_90 = arith.constant 0 : index
      %279 = vector.load %arg8[%c0_89, %c0_90] : memref<8x256xf32, #tpu.memory_space<vmem>>, vector<8x256xf32>
      tpu.vector_store %arg8[%c0_89, %c0_90], %278 {strides = array<i32>} : memref<8x256xf32, #tpu.memory_space<vmem>>, vector<8x256xf32>,
      %c0_91 = arith.constant 0 : index
      %c0_92 = arith.constant 0 : index
      %280 = vector.load %arg9[%c0_91, %c0_92] : memref<8x128xf32, #tpu.memory_space<vmem>>, vector<8x128xf32>
      tpu.vector_store %arg9[%c0_91, %c0_92], %268 {strides = array<i32>} : memref<8x128xf32, #tpu.memory_space<vmem>>, vector<8x128xf32>,
    } else {
    }
    return
  }
  func.func @transform_0(%arg0: i32, %arg1: i32) -> (i32, i32, i32) {
    %c0_i32 = arith.constant 0 : i32
    %c0_i32_0 = arith.constant 0 : i32
    return %arg0, %arg1, %c0_i32 : i32, i32, i32
  }
  func.func @transform_1(%arg0: i32, %arg1: i32) -> (i32, i32) {
    %c0_i32 = arith.constant 0 : i32
    %c0_i32_0 = arith.constant 0 : i32
    %c0_i32_1 = arith.constant 0 : i32
    return %c0_i32, %c0_i32_0 : i32, i32
  }
  func.func @transform_2(%arg0: i32, %arg1: i32) -> (i32, i32) {
    %c0_i32 = arith.constant 0 : i32
    %c0_i32_0 = arith.constant 0 : i32
    %c0_i32_1 = arith.constant 0 : i32
    return %c0_i32, %c0_i32_0 : i32, i32
  }
  func.func @transform_3(%arg0: i32, %arg1: i32) -> (i32, i32) {
    %c0_i32 = arith.constant 0 : i32
    %c0_i32_0 = arith.constant 0 : i32
    %c0_i32_1 = arith.constant 0 : i32
    return %c0_i32, %c0_i32_0 : i32, i32
  }
  func.func @transform_4(%arg0: i32, %arg1: i32) -> (i32, i32) {
    %c0_i32 = arith.constant 0 : i32
    %c0_i32_0 = arith.constant 0 : i32
    %c0_i32_1 = arith.constant 0 : i32
    return %c0_i32, %c0_i32_0 : i32, i32
  }
  func.func @transform_5(%arg0: i32, %arg1: i32) -> (i32, i32) {
    %c0_i32 = arith.constant 0 : i32
    %c0_i32_0 = arith.constant 0 : i32
    %c0_i32_1 = arith.constant 0 : i32
    return %c0_i32, %c0_i32_0 : i32, i32
  }
  func.func @transform_6(%arg0: i32, %arg1: i32) -> (i32, i32) {
    %c0_i32 = arith.constant 0 : i32
    %c0_i32_0 = arith.constant 0 : i32
    return %arg0, %c0_i32 : i32, i32
  }
  func.func @transform_7(%arg0: i32, %arg1: i32) -> (i32, i32) {
    %c0_i32 = arith.constant 0 : i32
    %c0_i32_0 = arith.constant 0 : i32
    return %arg0, %c0_i32 : i32, i32
  }
}

</mosaic_0001>

<llo_original>
// kernel: tpu_custom_call.1
$region0: #{tpu_custom_call.1}
  #allocation0 [shape = 'u32[]', space=smem, size = 0x4, offset = 0x4, fixed_abs, tag = 'smem constant byte address 0x4 - core index']
  #allocation1 [shape = 'u32[144,128]{1,0:T(1,128)}', space=vmem, size = 0x12000, scoped, tag = 'internal scratch']
  #allocation2 [shape = 'f32[64,512]{1,0:T(8,128)}', space=vmem, size = 0x20000, scoped, tag = 'scratch operand']
  #allocation3 [shape = 'f32[8,128]{1,0:T(8,128)}', space=vmem, size = 0x1000, scoped, tag = 'scratch operand']
  #allocation4 [shape = 'f32[8,128]{1,0:T(8,128)}', space=vmem, size = 0x1000, scoped, tag = 'scratch operand']
  %s0 = inlined_call_operand.vmem [shape: f32[1,64,16], index: 0, kind: input, shape index: {}]
  %s1 = inlined_call_operand.vmem [shape: f32[16,512], index: 1, kind: input, shape index: {}]
  %s2 = inlined_call_operand.hbm [shape: f32[128,512], index: 2, kind: input, shape index: {}]
  %s3 = inlined_call_operand.vmem [shape: f32[1,512], index: 3, kind: input, shape index: {}]
  %s4 = inlined_call_operand.hbm [shape: f32[128,256], index: 4, kind: input, shape index: {}]
  %s5 = inlined_call_operand.vmem [shape: f32[1,256], index: 5, kind: input, shape index: {}]
  %s6 = inlined_call_operand.hbm [shape: f32[8,256], index: 6, kind: output, shape index: {0}]
  %s7 = inlined_call_operand.hbm [shape: f32[8,128], index: 7, kind: output, shape index: {1}]
  %8 = xla_tuple %s6, %s7
  %s9 = sld [smem:[#allocation0]]
  $region58: #{tpu_custom_call.1} parent=0
    _
  %s11 = ssub.s32 1, %s9
  %s12 = scalar_select 0, %s11, %s9
  $region1: #{tpu_custom_call.1} parent=0
    #allocation5 [shape = 'u8[262144]{0}', space=vmem, size = 0x40000, scoped, tag = 'input window, operand 2, single buffered']
    #allocation6 [shape = 's32[1]{0}', space=sflag, size = 0x4, scoped, tag = 'scoped memory for tpu_custom_call.1']
    #allocation7 [shape = 's32[1]{0}', space=sflag, size = 0x4, scoped, tag = 'scoped memory for tpu_custom_call.1']
    #allocation8 [shape = 'u8[131072]{0}', space=vmem, size = 0x20000, scoped, tag = 'input window, operand 4, single buffered']
    #allocation9 [shape = 's32[1]{0}', space=sflag, size = 0x4, scoped, tag = 'scoped memory for tpu_custom_call.1']
    #allocation10 [shape = 'u8[8192]{0}', space=vmem, size = 0x2000, scoped, tag = 'output window, operand 0, single buffered']
    #allocation11 [shape = 'u8[4096]{0}', space=vmem, size = 0x1000, scoped, tag = 'output window, operand 1, single buffered']
    #allocation12 [shape = 's32[1]{0}', space=sflag, size = 0x4, scoped, tag = 'scoped memory for tpu_custom_call.1']
    %13 = vsyncpa [#allocation6], 0
    %14 = vsyncpa [#allocation9], 0
    %15 = vsyncpa [#allocation7], 0
    %16 = vsyncpa [#allocation12], 0
    // Predicated region
    $region2: #{tpu_custom_call.1} parent=1 // pred_check
      _
    $region3: #{tpu_custom_call.1} parent=1 // pred_check_branch
      %18 = sbr.rel (0) target = $region5
    $region4: #{tpu_custom_call.1} parent=1 // pred_region
      _
    $region5: #{tpu_custom_call.1} parent=1 // pred_fallthru
      _
    // Predicated region
    $region6: #{tpu_custom_call.1} parent=1 // pred_check
      _
    $region7: #{tpu_custom_call.1} parent=1 // pred_check_branch
      %20 = sbr.rel (0) target = $region9
    $region8: #{tpu_custom_call.1} parent=1 // pred_region
      _
    $region9: #{tpu_custom_call.1} parent=1 // pred_fallthru
      _
    // Predicated region
    $region10: #{tpu_custom_call.1} parent=1 // pred_check
      _
    $region11: #{tpu_custom_call.1} parent=1 // pred_check_branch
      %22 = sbr.rel (0) target = $region13
    $region12: #{tpu_custom_call.1} parent=1 // pred_region
      %s24 = ssub.s32 8192, 8192
      %25 = vsyncadd [#allocation6], %s24
      %s26 = sshll.u32 [#allocation5], 4
      %s27 = int_to_ptr.vmem [resolvable:$true] %s26
      %32 = dma.hbm_to_vmem [thread:$0]  %s2, 8192, %s27, [#allocation6], 512, 512, 32
    $region13: #{tpu_custom_call.1} parent=1 // pred_fallthru
      _
    // Predicated region
    $region14: #{tpu_custom_call.1} parent=1 // pred_check
      _
    $region15: #{tpu_custom_call.1} parent=1 // pred_check_branch
      %34 = sbr.rel (0) target = $region17
    $region16: #{tpu_custom_call.1} parent=1 // pred_region
      _
    $region17: #{tpu_custom_call.1} parent=1 // pred_fallthru
      _
    // Predicated region
    $region18: #{tpu_custom_call.1} parent=1 // pred_check
      _
    $region19: #{tpu_custom_call.1} parent=1 // pred_check_branch
      %36 = sbr.rel (0) target = $region21
    $region20: #{tpu_custom_call.1} parent=1 // pred_region
      %s38 = ssub.s32 4096, 4096
      %39 = vsyncadd [#allocation9], %s38
      %s40 = sshll.u32 [#allocation8], 4
      %s41 = int_to_ptr.vmem [resolvable:$true] %s40
      %46 = dma.hbm_to_vmem [thread:$0]  %s4, 4096, %s41, [#allocation9], 256, 256, 16
    $region21: #{tpu_custom_call.1} parent=1 // pred_fallthru
      _
    // Predicated region
    $region22: #{tpu_custom_call.1} parent=1 // pred_check
      _
    $region23: #{tpu_custom_call.1} parent=1 // pred_check_branch
      %48 = sbr.rel (0) target = $region25
    $region24: #{tpu_custom_call.1} parent=1 // pred_region
      _
    $region25: #{tpu_custom_call.1} parent=1 // pred_fallthru
      _
    // Predicated region
    $region26: #{tpu_custom_call.1} parent=1 // pred_check
      _
    $region27: #{tpu_custom_call.1} parent=1 // pred_check_branch
      %50 = sbr.rel (0) target = $region29
    $region28: #{tpu_custom_call.1} parent=1 // pred_region
      %51 = dma.done [#allocation6], 8192
    $region29: #{tpu_custom_call.1} parent=1 // pred_fallthru
      _
    // Predicated region
    $region30: #{tpu_custom_call.1} parent=1 // pred_check
      _
    $region31: #{tpu_custom_call.1} parent=1 // pred_check_branch
      %53 = sbr.rel (0) target = $region33
    $region32: #{tpu_custom_call.1} parent=1 // pred_region
      %54 = dma.done [#allocation9], 4096
    $region33: #{tpu_custom_call.1} parent=1 // pred_fallthru
      _
    %p55 = scmp.eq.s32.totalorder 0, 0
    // Predicated region
    $region34: #{tpu_custom_call.1} parent=1 // pred_check
      %p56 = pneg %p55
    $region35: #{tpu_custom_call.1} parent=1 // pred_check_branch
      %58 = sbr.rel (%p56) target = $region37
    $region36: #{tpu_custom_call.1} parent=1 // pred_region
      %59 = vst [vmem:[#allocation3] sm:$0xff] 0.0
      %60 = vst [vmem:[#allocation4] sm:$0xff] 0.0
    $region37: #{tpu_custom_call.1} parent=1 // pred_fallthru
      _
    %v61 = vld [vmem:[%s0] sm:$0xff]
    %v62 = vld [vmem:[%s0 + $0x8] sm:$0xff]
    %v63 = vld [vmem:[%s0 + $0x10] sm:$0xff]
    %v64 = vld [vmem:[%s0 + $0x18] sm:$0xff]
    %v65 = vld [vmem:[%s0 + $0x20] sm:$0xff]
    %v66 = vld [vmem:[%s0 + $0x28] sm:$0xff]
    %v67 = vld [vmem:[%s0 + $0x30] sm:$0xff]
    %v68 = vld [vmem:[%s0 + $0x38] sm:$0xff]
    %v69 = vld [vmem:[%s1] sm:$0xff]
    %v70 = vld [vmem:[%s1 + $0x8] sm:$0xff]
    %v71 = vld [vmem:[%s1 + $0x10] sm:$0xff]
    %v72 = vld [vmem:[%s1 + $0x18] sm:$0xff]
    %v73 = vld [vmem:[%s1 + $0x20] sm:$0xff]
    %v74 = vld [vmem:[%s1 + $0x28] sm:$0xff]
    %v75 = vld [vmem:[%s1 + $0x30] sm:$0xff]
    %v76 = vld [vmem:[%s1 + $0x38] sm:$0xff]
    %v77 = vld [vmem:[%s3] sm:$0xf]
    %v79 = vlaneseq
    %v80 = vshrl.u32 %v79, 7
    %v81 = vsub.s32 0, %v80
    %v82 = vrot.slane %v77, %v81
    %v83 = vlaneseq
    %v84 = vshrl.u32 %v83, 7
    %v85 = vsub.s32 1, %v84
    %v86 = vrot.slane %v77, %v85
    %v87 = vlaneseq
    %v88 = vshrl.u32 %v87, 7
    %v89 = vsub.s32 2, %v88
    %v90 = vrot.slane %v77, %v89
    %v91 = vlaneseq
    %v92 = vshrl.u32 %v91, 7
    %v93 = vsub.s32 3, %v92
    %v94 = vrot.slane %v77, %v93
    %vm99 = vcmask 130048
    %v101 = vsel %vm99, %v61, 0
    %v104 = vsel %vm99, %v62, 0
    %v107 = vsel %vm99, %v63, 0
    %v110 = vsel %vm99, %v64, 0
    %v113 = vsel %vm99, %v65, 0
    %v116 = vsel %vm99, %v66, 0
    %v119 = vsel %vm99, %v67, 0
    %v122 = vsel %vm99, %v68, 0
    %124 = vmatprep.subr.mxu0 0.0
    %125 = vmatpush1.msra.mxu0 0.0
    %126 = vmatprep.subr.mxu0 0.0
    %127 = vmatpush1.msra.mxu0 0.0
    %128 = vmatprep.subr.mxu0 0.0
    %129 = vmatpush1.msra.mxu0 0.0
    %130 = vmatprep.subr.mxu0 0.0
    %131 = vmatpush1.msra.mxu0 0.0
    %132 = vmatprep.subr.mxu0 0.0
    %133 = vmatpush1.msra.mxu0 0.0
    %134 = vmatprep.subr.mxu0 0.0
    %135 = vmatpush1.msra.mxu0 0.0
    %136 = vmatprep.subr.mxu0 0.0
    %137 = vmatpush1.msra.mxu0 0.0
    %138 = vmatprep.subr.mxu0 0.0
    %139 = vmatpush1.msra.mxu0 0.0
    %140 = vmatprep.subr.mxu0 0.0
    %141 = vmatpush1.msra.mxu0 0.0
    %142 = vmatprep.subr.mxu0 0.0
    %143 = vmatpush1.msra.mxu0 0.0
    %144 = vmatprep.subr.mxu0 0.0
    %145 = vmatpush1.msra.mxu0 0.0
    %146 = vmatprep.subr.mxu0 0.0
    %147 = vmatpush1.msra.mxu0 0.0
    %148 = vmatprep.subr.mxu0 0.0
    %149 = vmatpush1.msra.mxu0 0.0
    %150 = vmatprep.subr.mxu0 0.0
    %151 = vmatpush1.msra.mxu0 0.0
    %152 = vmatprep.subr.mxu0 %v74
    %153 = vmatpush1.msra.mxu0 %v73
    %154 = vmatprep.subr.mxu0 %v70
    %155 = vmatpush1.msra.mxu0 %v69
    %156 = vmatprep.subr.mxu0 0.0
    %157 = vmatpush2.msra.mxu0 0.0
    %158 = vmatprep.subr.mxu0 0.0
    %159 = vmatpush2.msra.mxu0 0.0
    %160 = vmatprep.subr.mxu0 0.0
    %161 = vmatpush2.msra.mxu0 0.0
    %162 = vmatprep.subr.mxu0 0.0
    %163 = vmatpush2.msra.mxu0 0.0
    %164 = vmatprep.subr.mxu0 0.0
    %165 = vmatpush2.msra.mxu0 0.0
    %166 = vmatprep.subr.mxu0 0.0
    %167 = vmatpush2.msra.mxu0 0.0
    %168 = vmatprep.subr.mxu0 0.0
    %169 = vmatpush2.msra.mxu0 0.0
    %170 = vmatprep.subr.mxu0 0.0
    %171 = vmatpush2.msra.mxu0 0.0
    %172 = vmatprep.subr.mxu0 0.0
    %173 = vmatpush2.msra.mxu0 0.0
    %174 = vmatprep.subr.mxu0 0.0
    %175 = vmatpush2.msra.mxu0 0.0
    %176 = vmatprep.subr.mxu0 0.0
    %177 = vmatpush2.msra.mxu0 0.0
    %178 = vmatprep.subr.mxu0 0.0
    %179 = vmatpush2.msra.mxu0 0.0
    %180 = vmatprep.subr.mxu0 0.0
    %181 = vmatpush2.msra.mxu0 0.0
    %182 = vmatprep.subr.mxu0 0.0
    %183 = vmatpush2.msra.mxu0 0.0
    %184 = vmatprep.subr.mxu0 0.0
    %185 = vmatpush2.msra.mxu0 0.0
    %186 = vmatprep.subr.mxu0 0.0
    %187 = vmatpush2.msra.mxu0 0.0
    %188 = vmatprep.mubr.f32.mxu0 0.0
    %189 = vmatmul.mubr.f32.gmra.mxu0 %v101
    %v190 = vpop.f32.mrf.mxu0
    %v191 = vadd.f32 %v82, %v190
    %v192 = vpop.f32.mrf.mxu0
    %v193 = vadd.f32 %v86, %v192
    %194 = vmatprep.mubr.f32.mxu0 0.0
    %195 = vmatmul.mubr.f32.gmra.mxu0 %v104
    %v196 = vpop.f32.mrf.mxu0
    %v197 = vadd.f32 %v82, %v196
    %v198 = vpop.f32.mrf.mxu0
    %v199 = vadd.f32 %v86, %v198
    %200 = vmatprep.mubr.f32.mxu0 0.0
    %201 = vmatmul.mubr.f32.gmra.mxu0 %v107
    %v202 = vpop.f32.mrf.mxu0
    %v203 = vadd.f32 %v82, %v202
    %v204 = vpop.f32.mrf.mxu0
    %v205 = vadd.f32 %v86, %v204
    %206 = vmatprep.mubr.f32.mxu0 0.0
    %207 = vmatmul.mubr.f32.gmra.mxu0 %v110
    %v208 = vpop.f32.mrf.mxu0
    %v209 = vadd.f32 %v82, %v208
    %v210 = vpop.f32.mrf.mxu0
    %v211 = vadd.f32 %v86, %v210
    %212 = vmatprep.mubr.f32.mxu0 0.0
    %213 = vmatmul.mubr.f32.gmra.mxu0 %v113
    %v214 = vpop.f32.mrf.mxu0
    %v215 = vadd.f32 %v82, %v214
    %v216 = vpop.f32.mrf.mxu0
    %v217 = vadd.f32 %v86, %v216
    %218 = vmatprep.mubr.f32.mxu0 0.0
    %219 = vmatmul.mubr.f32.gmra.mxu0 %v116
    %v220 = vpop.f32.mrf.mxu0
    %v221 = vadd.f32 %v82, %v220
    %v222 = vpop.f32.mrf.mxu0
    %v223 = vadd.f32 %v86, %v222
    %224 = vmatprep.mubr.f32.mxu0 0.0
    %225 = vmatmul.mubr.f32.gmra.mxu0 %v119
    %v226 = vpop.f32.mrf.mxu0
    %v227 = vadd.f32 %v82, %v226
    %v228 = vpop.f32.mrf.mxu0
    %v229 = vadd.f32 %v86, %v228
    %230 = vmatprep.mubr.f32.mxu0 0.0
    %231 = vmatmul.mubr.f32.gmra.mxu0 %v122
    %v232 = vpop.f32.mrf.mxu0
    %v233 = vadd.f32 %v82, %v232
    %v234 = vpop.f32.mrf.mxu0
    %v235 = vadd.f32 %v86, %v234
    %236 = vdwg.mxu0
    %237 = vmatprep.subr.mxu0 0.0
    %238 = vmatpush1.msra.mxu0 0.0
    %239 = vmatprep.subr.mxu0 0.0
    %240 = vmatpush1.msra.mxu0 0.0
    %241 = vmatprep.subr.mxu0 0.0
    %242 = vmatpush1.msra.mxu0 0.0
    %243 = vmatprep.subr.mxu0 0.0
    %244 = vmatpush1.msra.mxu0 0.0
    %245 = vmatprep.subr.mxu0 0.0
    %246 = vmatpush1.msra.mxu0 0.0
    %247 = vmatprep.subr.mxu0 0.0
    %248 = vmatpush1.msra.mxu0 0.0
    %249 = vmatprep.subr.mxu0 0.0
    %250 = vmatpush1.msra.mxu0 0.0
    %251 = vmatprep.subr.mxu0 0.0
    %252 = vmatpush1.msra.mxu0 0.0
    %253 = vmatprep.subr.mxu0 0.0
    %254 = vmatpush1.msra.mxu0 0.0
    %255 = vmatprep.subr.mxu0 0.0
    %256 = vmatpush1.msra.mxu0 0.0
    %257 = vmatprep.subr.mxu0 0.0
    %258 = vmatpush1.msra.mxu0 0.0
    %259 = vmatprep.subr.mxu0 0.0
    %260 = vmatpush1.msra.mxu0 0.0
    %261 = vmatprep.subr.mxu0 0.0
    %262 = vmatpush1.msra.mxu0 0.0
    %263 = vmatprep.subr.mxu0 0.0
    %264 = vmatpush1.msra.mxu0 0.0
    %265 = vmatprep.subr.mxu0 %v76
    %266 = vmatpush1.msra.mxu0 %v75
    %267 = vmatprep.subr.mxu0 %v72
    %268 = vmatpush1.msra.mxu0 %v71
    %269 = vmatprep.subr.mxu0 0.0
    %270 = vmatpush2.msra.mxu0 0.0
    %271 = vmatprep.subr.mxu0 0.0
    %272 = vmatpush2.msra.mxu0 0.0
    %273 = vmatprep.subr.mxu0 0.0
    %274 = vmatpush2.msra.mxu0 0.0
    %275 = vmatprep.subr.mxu0 0.0
    %276 = vmatpush2.msra.mxu0 0.0
    %277 = vmatprep.subr.mxu0 0.0
    %278 = vmatpush2.msra.mxu0 0.0
    %279 = vmatprep.subr.mxu0 0.0
    %280 = vmatpush2.msra.mxu0 0.0
    %281 = vmatprep.subr.mxu0 0.0
    %282 = vmatpush2.msra.mxu0 0.0
    %283 = vmatprep.subr.mxu0 0.0
    %284 = vmatpush2.msra.mxu0 0.0
    %285 = vmatprep.subr.mxu0 0.0
    %286 = vmatpush2.msra.mxu0 0.0
    %287 = vmatprep.subr.mxu0 0.0
    %288 = vmatpush2.msra.mxu0 0.0
    %289 = vmatprep.subr.mxu0 0.0
    %290 = vmatpush2.msra.mxu0 0.0
    %291 = vmatprep.subr.mxu0 0.0
    %292 = vmatpush2.msra.mxu0 0.0
    %293 = vmatprep.subr.mxu0 0.0
    %294 = vmatpush2.msra.mxu0 0.0
    %295 = vmatprep.subr.mxu0 0.0
    %296 = vmatpush2.msra.mxu0 0.0
    %297 = vmatprep.subr.mxu0 0.0
    %298 = vmatpush2.msra.mxu0 0.0
    %299 = vmatprep.subr.mxu0 0.0
    %300 = vmatpush2.msra.mxu0 0.0
    %301 = vmatprep.mubr.f32.mxu0 0.0
    %302 = vmatmul.mubr.f32.gmra.mxu0 %v101
    %v303 = vpop.f32.mrf.mxu0
    %v304 = vadd.f32 %v90, %v303
    %v305 = vpop.f32.mrf.mxu0
    %v306 = vadd.f32 %v94, %v305
    %307 = vmatprep.mubr.f32.mxu0 0.0
    %308 = vmatmul.mubr.f32.gmra.mxu0 %v104
    %v309 = vpop.f32.mrf.mxu0
    %v310 = vadd.f32 %v90, %v309
    %v311 = vpop.f32.mrf.mxu0
    %v312 = vadd.f32 %v94, %v311
    %313 = vmatprep.mubr.f32.mxu0 0.0
    %314 = vmatmul.mubr.f32.gmra.mxu0 %v107
    %v315 = vpop.f32.mrf.mxu0
    %v316 = vadd.f32 %v90, %v315
    %v317 = vpop.f32.mrf.mxu0
    %v318 = vadd.f32 %v94, %v317
    %319 = vmatprep.mubr.f32.mxu0 0.0
    %320 = vmatmul.mubr.f32.gmra.mxu0 %v110
    %v321 = vpop.f32.mrf.mxu0
    %v322 = vadd.f32 %v90, %v321
    %v323 = vpop.f32.mrf.mxu0
    %v324 = vadd.f32 %v94, %v323
    %325 = vmatprep.mubr.f32.mxu0 0.0
    %326 = vmatmul.mubr.f32.gmra.mxu0 %v113
    %v327 = vpop.f32.mrf.mxu0
    %v328 = vadd.f32 %v90, %v327
    %v329 = vpop.f32.mrf.mxu0
    %v330 = vadd.f32 %v94, %v329
    %331 = vmatprep.mubr.f32.mxu0 0.0
    %332 = vmatmul.mubr.f32.gmra.mxu0 %v116
    %v333 = vpop.f32.mrf.mxu0
    %v334 = vadd.f32 %v90, %v333
    %v335 = vpop.f32.mrf.mxu0
    %v336 = vadd.f32 %v94, %v335
    %337 = vmatprep.mubr.f32.mxu0 0.0
    %338 = vmatmul.mubr.f32.gmra.mxu0 %v119
    %v339 = vpop.f32.mrf.mxu0
    %v340 = vadd.f32 %v90, %v339
    %v341 = vpop.f32.mrf.mxu0
    %v342 = vadd.f32 %v94, %v341
    %343 = vmatprep.mubr.f32.mxu0 0.0
    %344 = vmatmul.mubr.f32.gmra.mxu0 %v122
    %v345 = vpop.f32.mrf.mxu0
    %v346 = vadd.f32 %v90, %v345
    %v347 = vpop.f32.mrf.mxu0
    %v348 = vadd.f32 %v94, %v347
    %349 = vdwg.mxu0
    %350 = vst [vmem:[#allocation2] sm:$0xff] %v191
    %351 = vst [vmem:[#allocation2 + $0x8] sm:$0xff] %v193
    %352 = vst [vmem:[#allocation2 + $0x10] sm:$0xff] %v304
    %353 = vst [vmem:[#allocation2 + $0x18] sm:$0xff] %v306
    %354 = vst [vmem:[#allocation2 + $0x20] sm:$0xff] %v197
    %355 = vst [vmem:[#allocation2 + $0x28] sm:$0xff] %v199
    %356 = vst [vmem:[#allocation2 + $0x30] sm:$0xff] %v310
    %357 = vst [vmem:[#allocation2 + $0x38] sm:$0xff] %v312
    %358 = vst [vmem:[#allocation2 + $0x40] sm:$0xff] %v203
    %359 = vst [vmem:[#allocation2 + $0x48] sm:$0xff] %v205
    %360 = vst [vmem:[#allocation2 + $0x50] sm:$0xff] %v316
    %361 = vst [vmem:[#allocation2 + $0x58] sm:$0xff] %v318
    %362 = vst [vmem:[#allocation2 + $0x60] sm:$0xff] %v209
    %363 = vst [vmem:[#allocation2 + $0x68] sm:$0xff] %v211
    %364 = vst [vmem:[#allocation2 + $0x70] sm:$0xff] %v322
    %365 = vst [vmem:[#allocation2 + $0x78] sm:$0xff] %v324
    %366 = vst [vmem:[#allocation2 + $0x80] sm:$0xff] %v215
    %367 = vst [vmem:[#allocation2 + $0x88] sm:$0xff] %v217
    %368 = vst [vmem:[#allocation2 + $0x90] sm:$0xff] %v328
    %369 = vst [vmem:[#allocation2 + $0x98] sm:$0xff] %v330
    %370 = vst [vmem:[#allocation2 + $0xa0] sm:$0xff] %v221
    %371 = vst [vmem:[#allocation2 + $0xa8] sm:$0xff] %v223
    %372 = vst [vmem:[#allocation2 + $0xb0] sm:$0xff] %v334
    %373 = vst [vmem:[#allocation2 + $0xb8] sm:$0xff] %v336
    %374 = vst [vmem:[#allocation2 + $0xc0] sm:$0xff] %v227
    %375 = vst [vmem:[#allocation2 + $0xc8] sm:$0xff] %v229
    %376 = vst [vmem:[#allocation2 + $0xd0] sm:$0xff] %v340
    %377 = vst [vmem:[#allocation2 + $0xd8] sm:$0xff] %v342
    %378 = vst [vmem:[#allocation2 + $0xe0] sm:$0xff] %v233
    %379 = vst [vmem:[#allocation2 + $0xe8] sm:$0xff] %v235
    %380 = vst [vmem:[#allocation2 + $0xf0] sm:$0xff] %v346
    %381 = vst [vmem:[#allocation2 + $0xf8] sm:$0xff] %v348
    %v382 = vld [vmem:[#allocation3] sm:$0xff]
    %v383 = vld [vmem:[#allocation4] sm:$0xff]
    %s384 = smul.u32 0, 4
    %s385 = smul.addr %s384, 8
    %s386 = scalar_lea.vmem [#allocation2], %s385
    %v387 = vld [vmem:[%s386] sm:$0xff]
    %v388 = vld [vmem:[%s386 + $0x8] sm:$0xff]
    %v389 = vld [vmem:[%s386 + $0x10] sm:$0xff]
    %v390 = vld [vmem:[%s386 + $0x18] sm:$0xff]
    %v391 = vld [vmem:[#allocation5] sm:$0xff]
    %v392 = vld [vmem:[#allocation5 + $0x8] sm:$0xff]
    %v393 = vld [vmem:[#allocation5 + $0x10] sm:$0xff]
    %v394 = vld [vmem:[#allocation5 + $0x18] sm:$0xff]
    %v395 = vld [vmem:[#allocation5 + $0x20] sm:$0xff]
    %v396 = vld [vmem:[#allocation5 + $0x28] sm:$0xff]
    %v397 = vld [vmem:[#allocation5 + $0x30] sm:$0xff]
    %v398 = vld [vmem:[#allocation5 + $0x38] sm:$0xff]
    %v399 = vld [vmem:[#allocation5 + $0x40] sm:$0xff]
    %v400 = vld [vmem:[#allocation5 + $0x48] sm:$0xff]
    %v401 = vld [vmem:[#allocation5 + $0x50] sm:$0xff]
    %v402 = vld [vmem:[#allocation5 + $0x58] sm:$0xff]
    %v403 = vld [vmem:[#allocation5 + $0x60] sm:$0xff]
    %v404 = vld [vmem:[#allocation5 + $0x68] sm:$0xff]
    %v405 = vld [vmem:[#allocation5 + $0x70] sm:$0xff]
    %v406 = vld [vmem:[#allocation5 + $0x78] sm:$0xff]
    %v407 = vld [vmem:[#allocation5 + $0x80] sm:$0xff]
    %v408 = vld [vmem:[#allocation5 + $0x88] sm:$0xff]
    %v409 = vld [vmem:[#allocation5 + $0x90] sm:$0xff]
    %v410 = vld [vmem:[#allocation5 + $0x98] sm:$0xff]
    %v411 = vld [vmem:[#allocation5 + $0xa0] sm:$0xff]
    %v412 = vld [vmem:[#allocation5 + $0xa8] sm:$0xff]
    %v413 = vld [vmem:[#allocation5 + $0xb0] sm:$0xff]
    %v414 = vld [vmem:[#allocation5 + $0xb8] sm:$0xff]
    %v415 = vld [vmem:[#allocation5 + $0xc0] sm:$0xff]
    %v416 = vld [vmem:[#allocation5 + $0xc8] sm:$0xff]
    %v417 = vld [vmem:[#allocation5 + $0xd0] sm:$0xff]
    %v418 = vld [vmem:[#allocation5 + $0xd8] sm:$0xff]
    %v419 = vld [vmem:[#allocation5 + $0xe0] sm:$0xff]
    %v420 = vld [vmem:[#allocation5 + $0xe8] sm:$0xff]
    %v421 = vld [vmem:[#allocation5 + $0xf0] sm:$0xff]
    %v422 = vld [vmem:[#allocation5 + $0xf8] sm:$0xff]
    %v423 = vld [vmem:[#allocation5 + $0x100] sm:$0xff]
    %v424 = vld [vmem:[#allocation5 + $0x108] sm:$0xff]
    %v425 = vld [vmem:[#allocation5 + $0x110] sm:$0xff]
    %v426 = vld [vmem:[#allocation5 + $0x118] sm:$0xff]
    %v427 = vld [vmem:[#allocation5 + $0x120] sm:$0xff]
    %v428 = vld [vmem:[#allocation5 + $0x128] sm:$0xff]
    %v429 = vld [vmem:[#allocation5 + $0x130] sm:$0xff]
    %v430 = vld [vmem:[#allocation5 + $0x138] sm:$0xff]
    %v431 = vld [vmem:[#allocation5 + $0x140] sm:$0xff]
    %v432 = vld [vmem:[#allocation5 + $0x148] sm:$0xff]
    %v433 = vld [vmem:[#allocation5 + $0x150] sm:$0xff]
    %v434 = vld [vmem:[#allocation5 + $0x158] sm:$0xff]
    %v435 = vld [vmem:[#allocation5 + $0x160] sm:$0xff]
    %v436 = vld [vmem:[#allocation5 + $0x168] sm:$0xff]
    %v437 = vld [vmem:[#allocation5 + $0x170] sm:$0xff]
    %v438 = vld [vmem:[#allocation5 + $0x178] sm:$0xff]
    %v439 = vld [vmem:[#allocation5 + $0x180] sm:$0xff]
    %v440 = vld [vmem:[#allocation5 + $0x188] sm:$0xff]
    %v441 = vld [vmem:[#allocation5 + $0x190] sm:$0xff]
    %v442 = vld [vmem:[#allocation5 + $0x198] sm:$0xff]
    %v443 = vld [vmem:[#allocation5 + $0x1a0] sm:$0xff]
    %v444 = vld [vmem:[#allocation5 + $0x1a8] sm:$0xff]
    %v445 = vld [vmem:[#allocation5 + $0x1b0] sm:$0xff]
    %v446 = vld [vmem:[#allocation5 + $0x1b8] sm:$0xff]
    %v447 = vld [vmem:[#allocation5 + $0x1c0] sm:$0xff]
    %v448 = vld [vmem:[#allocation5 + $0x1c8] sm:$0xff]
    %v449 = vld [vmem:[#allocation5 + $0x1d0] sm:$0xff]
    %v450 = vld [vmem:[#allocation5 + $0x1d8] sm:$0xff]
    %v451 = vld [vmem:[#allocation5 + $0x1e0] sm:$0xff]
    %v452 = vld [vmem:[#allocation5 + $0x1e8] sm:$0xff]
    %v453 = vld [vmem:[#allocation5 + $0x1f0] sm:$0xff]
    %v454 = vld [vmem:[#allocation5 + $0x1f8] sm:$0xff]
    %455 = vmatprep.subr.mxu0 %v452
    %456 = vmatpush1.msra.mxu0 %v451
    %457 = vmatprep.subr.mxu0 %v448
    %458 = vmatpush1.msra.mxu0 %v447
    %459 = vmatprep.subr.mxu0 %v444
    %460 = vmatpush1.msra.mxu0 %v443
    %461 = vmatprep.subr.mxu0 %v440
    %462 = vmatpush1.msra.mxu0 %v439
    %463 = vmatprep.subr.mxu0 %v436
    %464 = vmatpush1.msra.mxu0 %v435
    %465 = vmatprep.subr.mxu0 %v432
    %466 = vmatpush1.msra.mxu0 %v431
    %467 = vmatprep.subr.mxu0 %v428
    %468 = vmatpush1.msra.mxu0 %v427
    %469 = vmatprep.subr.mxu0 %v424
    %470 = vmatpush1.msra.mxu0 %v423
    %471 = vmatprep.subr.mxu0 %v420
    %472 = vmatpush1.msra.mxu0 %v419
    %473 = vmatprep.subr.mxu0 %v416
    %474 = vmatpush1.msra.mxu0 %v415
    %475 = vmatprep.subr.mxu0 %v412
    %476 = vmatpush1.msra.mxu0 %v411
    %477 = vmatprep.subr.mxu0 %v408
    %478 = vmatpush1.msra.mxu0 %v407
    %479 = vmatprep.subr.mxu0 %v404
    %480 = vmatpush1.msra.mxu0 %v403
    %481 = vmatprep.subr.mxu0 %v400
    %482 = vmatpush1.msra.mxu0 %v399
    %483 = vmatprep.subr.mxu0 %v396
    %484 = vmatpush1.msra.mxu0 %v395
    %485 = vmatprep.subr.mxu0 %v392
    %486 = vmatpush1.msra.mxu0 %v391
    %487 = vmatprep.subr.mxu0 0.0
    %488 = vmatpush2.msra.mxu0 0.0
    %489 = vmatprep.subr.mxu0 0.0
    %490 = vmatpush2.msra.mxu0 0.0
    %491 = vmatprep.subr.mxu0 0.0
    %492 = vmatpush2.msra.mxu0 0.0
    %493 = vmatprep.subr.mxu0 0.0
    %494 = vmatpush2.msra.mxu0 0.0
    %495 = vmatprep.subr.mxu0 0.0
    %496 = vmatpush2.msra.mxu0 0.0
    %497 = vmatprep.subr.mxu0 0.0
    %498 = vmatpush2.msra.mxu0 0.0
    %499 = vmatprep.subr.mxu0 0.0
    %500 = vmatpush2.msra.mxu0 0.0
    %501 = vmatprep.subr.mxu0 0.0
    %502 = vmatpush2.msra.mxu0 0.0
    %503 = vmatprep.subr.mxu0 0.0
    %504 = vmatpush2.msra.mxu0 0.0
    %505 = vmatprep.subr.mxu0 0.0
    %506 = vmatpush2.msra.mxu0 0.0
    %507 = vmatprep.subr.mxu0 0.0
    %508 = vmatpush2.msra.mxu0 0.0
    %509 = vmatprep.subr.mxu0 0.0
    %510 = vmatpush2.msra.mxu0 0.0
    %511 = vmatprep.subr.mxu0 0.0
    %512 = vmatpush2.msra.mxu0 0.0
    %513 = vmatprep.subr.mxu0 0.0
    %514 = vmatpush2.msra.mxu0 0.0
    %515 = vmatprep.subr.mxu0 0.0
    %516 = vmatpush2.msra.mxu0 0.0
    %517 = vmatprep.subr.mxu0 0.0
    %518 = vmatpush2.msra.mxu0 0.0
    %519 = vmatprep.mubr.f32.mxu0 0.0
    %520 = vmatmul.mubr.f32.gmra.mxu0 %v382
    %v521 = vpop.f32.mrf.mxu0
    %v522 = vadd.f32 0.0, %v521
    %v523 = vpop.f32.mrf.mxu0
    %v524 = vadd.f32 0.0, %v523
    %525 = vdwg.mxu0
    %526 = vmatprep.subr.mxu0 %v454
    %527 = vmatpush1.msra.mxu0 %v453
    %528 = vmatprep.subr.mxu0 %v450
    %529 = vmatpush1.msra.mxu0 %v449
    %530 = vmatprep.subr.mxu0 %v446
    %531 = vmatpush1.msra.mxu0 %v445
    %532 = vmatprep.subr.mxu0 %v442
    %533 = vmatpush1.msra.mxu0 %v441
    %534 = vmatprep.subr.mxu0 %v438
    %535 = vmatpush1.msra.mxu0 %v437
    %536 = vmatprep.subr.mxu0 %v434
    %537 = vmatpush1.msra.mxu0 %v433
    %538 = vmatprep.subr.mxu0 %v430
    %539 = vmatpush1.msra.mxu0 %v429
    %540 = vmatprep.subr.mxu0 %v426
    %541 = vmatpush1.msra.mxu0 %v425
    %542 = vmatprep.subr.mxu0 %v422
    %543 = vmatpush1.msra.mxu0 %v421
    %544 = vmatprep.subr.mxu0 %v418
    %545 = vmatpush1.msra.mxu0 %v417
    %546 = vmatprep.subr.mxu0 %v414
    %547 = vmatpush1.msra.mxu0 %v413
    %548 = vmatprep.subr.mxu0 %v410
    %549 = vmatpush1.msra.mxu0 %v409
    %550 = vmatprep.subr.mxu0 %v406
    %551 = vmatpush1.msra.mxu0 %v405
    %552 = vmatprep.subr.mxu0 %v402
    %553 = vmatpush1.msra.mxu0 %v401
    %554 = vmatprep.subr.mxu0 %v398
    %555 = vmatpush1.msra.mxu0 %v397
    %556 = vmatprep.subr.mxu0 %v394
    %557 = vmatpush1.msra.mxu0 %v393
    %558 = vmatprep.subr.mxu0 0.0
    %559 = vmatpush2.msra.mxu0 0.0
    %560 = vmatprep.subr.mxu0 0.0
    %561 = vmatpush2.msra.mxu0 0.0
    %562 = vmatprep.subr.mxu0 0.0
    %563 = vmatpush2.msra.mxu0 0.0
    %564 = vmatprep.subr.mxu0 0.0
    %565 = vmatpush2.msra.mxu0 0.0
    %566 = vmatprep.subr.mxu0 0.0
    %567 = vmatpush2.msra.mxu0 0.0
    %568 = vmatprep.subr.mxu0 0.0
    %569 = vmatpush2.msra.mxu0 0.0
    %570 = vmatprep.subr.mxu0 0.0
    %571 = vmatpush2.msra.mxu0 0.0
    %572 = vmatprep.subr.mxu0 0.0
    %573 = vmatpush2.msra.mxu0 0.0
    %574 = vmatprep.subr.mxu0 0.0
    %575 = vmatpush2.msra.mxu0 0.0
    %576 = vmatprep.subr.mxu0 0.0
    %577 = vmatpush2.msra.mxu0 0.0
    %578 = vmatprep.subr.mxu0 0.0
    %579 = vmatpush2.msra.mxu0 0.0
    %580 = vmatprep.subr.mxu0 0.0
    %581 = vmatpush2.msra.mxu0 0.0
    %582 = vmatprep.subr.mxu0 0.0
    %583 = vmatpush2.msra.mxu0 0.0
    %584 = vmatprep.subr.mxu0 0.0
    %585 = vmatpush2.msra.mxu0 0.0
    %586 = vmatprep.subr.mxu0 0.0
    %587 = vmatpush2.msra.mxu0 0.0
    %588 = vmatprep.subr.mxu0 0.0
    %589 = vmatpush2.msra.mxu0 0.0
    %590 = vmatprep.mubr.f32.mxu0 0.0
    %591 = vmatmul.mubr.f32.gmra.mxu0 %v382
    %v592 = vpop.f32.mrf.mxu0
    %v593 = vadd.f32 0.0, %v592
    %v594 = vpop.f32.mrf.mxu0
    %v595 = vadd.f32 0.0, %v594
    %596 = vdwg.mxu0
    %v597 = vadd.f32 %v387, %v522
    %v598 = vadd.f32 %v388, %v524
    %v599 = vadd.f32 %v389, %v593
    %v600 = vadd.f32 %v390, %v595
    %v601 = vxor.u32 %v597, 2147483648
    %v602 = vmul.f32 %v601, 1.442695
    %v603 = vpow.pop %v602
    %v604 = vadd.f32 %v603, 1.0
    %v605 = vrcp.pop %v604
    %v606 = vmul.f32 1.0, %v605
    %v607 = vxor.u32 %v598, 2147483648
    %v608 = vmul.f32 %v607, 1.442695
    %v609 = vpow.pop %v608
    %v610 = vadd.f32 %v609, 1.0
    %v611 = vrcp.pop %v610
    %v612 = vmul.f32 1.0, %v611
    %v613 = vtanh.pop %v599
    %v614 = vxor.u32 %v600, 2147483648
    %v615 = vmul.f32 %v614, 1.442695
    %v616 = vpow.pop %v615
    %v617 = vadd.f32 %v616, 1.0
    %v618 = vrcp.pop %v617
    %v619 = vmul.f32 1.0, %v618
    %v620 = vmul.f32 %v612, %v383
    %v621 = vmul.f32 %v606, %v613
    %v622 = vadd.f32 %v620, %v621
    %v623 = vtanh.pop %v622
    %v624 = vmul.f32 %v619, %v623
    %s625 = smul.u32 1, 4
    %s626 = smul.addr %s625, 8
    %s627 = scalar_lea.vmem [#allocation2], %s626
    %v628 = vld [vmem:[%s627] sm:$0xff]
    %v629 = vld [vmem:[%s627 + $0x8] sm:$0xff]
    %v630 = vld [vmem:[%s627 + $0x10] sm:$0xff]
    %v631 = vld [vmem:[%s627 + $0x18] sm:$0xff]
    %632 = vmatprep.subr.mxu0 %v452
    %633 = vmatpush1.msra.mxu0 %v451
    %634 = vmatprep.subr.mxu0 %v448
    %635 = vmatpush1.msra.mxu0 %v447
    %636 = vmatprep.subr.mxu0 %v444
    %637 = vmatpush1.msra.mxu0 %v443
    %638 = vmatprep.subr.mxu0 %v440
    %639 = vmatpush1.msra.mxu0 %v439
    %640 = vmatprep.subr.mxu0 %v436
    %641 = vmatpush1.msra.mxu0 %v435
    %642 = vmatprep.subr.mxu0 %v432
    %643 = vmatpush1.msra.mxu0 %v431
    %644 = vmatprep.subr.mxu0 %v428
    %645 = vmatpush1.msra.mxu0 %v427
    %646 = vmatprep.subr.mxu0 %v424
    %647 = vmatpush1.msra.mxu0 %v423
    %648 = vmatprep.subr.mxu0 %v420
    %649 = vmatpush1.msra.mxu0 %v419
    %650 = vmatprep.subr.mxu0 %v416
    %651 = vmatpush1.msra.mxu0 %v415
    %652 = vmatprep.subr.mxu0 %v412
    %653 = vmatpush1.msra.mxu0 %v411
    %654 = vmatprep.subr.mxu0 %v408
    %655 = vmatpush1.msra.mxu0 %v407
    %656 = vmatprep.subr.mxu0 %v404
    %657 = vmatpush1.msra.mxu0 %v403
    %658 = vmatprep.subr.mxu0 %v400
    %659 = vmatpush1.msra.mxu0 %v399
    %660 = vmatprep.subr.mxu0 %v396
    %661 = vmatpush1.msra.mxu0 %v395
    %662 = vmatprep.subr.mxu0 %v392
    %663 = vmatpush1.msra.mxu0 %v391
    %664 = vmatprep.subr.mxu0 0.0
    %665 = vmatpush2.msra.mxu0 0.0
    %666 = vmatprep.subr.mxu0 0.0
    %667 = vmatpush2.msra.mxu0 0.0
    %668 = vmatprep.subr.mxu0 0.0
    %669 = vmatpush2.msra.mxu0 0.0
    %670 = vmatprep.subr.mxu0 0.0
    %671 = vmatpush2.msra.mxu0 0.0
    %672 = vmatprep.subr.mxu0 0.0
    %673 = vmatpush2.msra.mxu0 0.0
    %674 = vmatprep.subr.mxu0 0.0
    %675 = vmatpush2.msra.mxu0 0.0
    %676 = vmatprep.subr.mxu0 0.0
    %677 = vmatpush2.msra.mxu0 0.0
    %678 = vmatprep.subr.mxu0 0.0
    %679 = vmatpush2.msra.mxu0 0.0
    %680 = vmatprep.subr.mxu0 0.0
    %681 = vmatpush2.msra.mxu0 0.0
    %682 = vmatprep.subr.mxu0 0.0
    %683 = vmatpush2.msra.mxu0 0.0
    %684 = vmatprep.subr.mxu0 0.0
    %685 = vmatpush2.msra.mxu0 0.0
    %686 = vmatprep.subr.mxu0 0.0
    %687 = vmatpush2.msra.mxu0 0.0
    %688 = vmatprep.subr.mxu0 0.0
    %689 = vmatpush2.msra.mxu0 0.0
    %690 = vmatprep.subr.mxu0 0.0
    %691 = vmatpush2.msra.mxu0 0.0
    %692 = vmatprep.subr.mxu0 0.0
    %693 = vmatpush2.msra.mxu0 0.0
    %694 = vmatprep.subr.mxu0 0.0
    %695 = vmatpush2.msra.mxu0 0.0
    %696 = vmatprep.mubr.f32.mxu0 0.0
    %697 = vmatmul.mubr.f32.gmra.mxu0 %v624
    %v698 = vpop.f32.mrf.mxu0
    %v699 = vadd.f32 0.0, %v698
    %v700 = vpop.f32.mrf.mxu0
    %v701 = vadd.f32 0.0, %v700
    %702 = vdwg.mxu0
    %703 = vmatprep.subr.mxu0 %v454
    %704 = vmatpush1.msra.mxu0 %v453
    %705 = vmatprep.subr.mxu0 %v450
    %706 = vmatpush1.msra.mxu0 %v449
    %707 = vmatprep.subr.mxu0 %v446
    %708 = vmatpush1.msra.mxu0 %v445
    %709 = vmatprep.subr.mxu0 %v442
    %710 = vmatpush1.msra.mxu0 %v441
    %711 = vmatprep.subr.mxu0 %v438
    %712 = vmatpush1.msra.mxu0 %v437
    %713 = vmatprep.subr.mxu0 %v434
    %714 = vmatpush1.msra.mxu0 %v433
    %715 = vmatprep.subr.mxu0 %v430
    %716 = vmatpush1.msra.mxu0 %v429
    %717 = vmatprep.subr.mxu0 %v426
    %718 = vmatpush1.msra.mxu0 %v425
    %719 = vmatprep.subr.mxu0 %v422
    %720 = vmatpush1.msra.mxu0 %v421
    %721 = vmatprep.subr.mxu0 %v418
    %722 = vmatpush1.msra.mxu0 %v417
    %723 = vmatprep.subr.mxu0 %v414
    %724 = vmatpush1.msra.mxu0 %v413
    %725 = vmatprep.subr.mxu0 %v410
    %726 = vmatpush1.msra.mxu0 %v409
    %727 = vmatprep.subr.mxu0 %v406
    %728 = vmatpush1.msra.mxu0 %v405
    %729 = vmatprep.subr.mxu0 %v402
    %730 = vmatpush1.msra.mxu0 %v401
    %731 = vmatprep.subr.mxu0 %v398
    %732 = vmatpush1.msra.mxu0 %v397
    %733 = vmatprep.subr.mxu0 %v394
    %734 = vmatpush1.msra.mxu0 %v393
    %735 = vmatprep.subr.mxu0 0.0
    %736 = vmatpush2.msra.mxu0 0.0
    %737 = vmatprep.subr.mxu0 0.0
    %738 = vmatpush2.msra.mxu0 0.0
    %739 = vmatprep.subr.mxu0 0.0
    %740 = vmatpush2.msra.mxu0 0.0
    %741 = vmatprep.subr.mxu0 0.0
    %742 = vmatpush2.msra.mxu0 0.0
    %743 = vmatprep.subr.mxu0 0.0
    %744 = vmatpush2.msra.mxu0 0.0
    %745 = vmatprep.subr.mxu0 0.0
    %746 = vmatpush2.msra.mxu0 0.0
    %747 = vmatprep.subr.mxu0 0.0
    %748 = vmatpush2.msra.mxu0 0.0
    %749 = vmatprep.subr.mxu0 0.0
    %750 = vmatpush2.msra.mxu0 0.0
    %751 = vmatprep.subr.mxu0 0.0
    %752 = vmatpush2.msra.mxu0 0.0
    %753 = vmatprep.subr.mxu0 0.0
    %754 = vmatpush2.msra.mxu0 0.0
    %755 = vmatprep.subr.mxu0 0.0
    %756 = vmatpush2.msra.mxu0 0.0
    %757 = vmatprep.subr.mxu0 0.0
    %758 = vmatpush2.msra.mxu0 0.0
    %759 = vmatprep.subr.mxu0 0.0
    %760 = vmatpush2.msra.mxu0 0.0
    %761 = vmatprep.subr.mxu0 0.0
    %762 = vmatpush2.msra.mxu0 0.0
    %763 = vmatprep.subr.mxu0 0.0
    %764 = vmatpush2.msra.mxu0 0.0
    %765 = vmatprep.subr.mxu0 0.0
    %766 = vmatpush2.msra.mxu0 0.0
    %767 = vmatprep.mubr.f32.mxu0 0.0
    %768 = vmatmul.mubr.f32.gmra.mxu0 %v624
    %v769 = vpop.f32.mrf.mxu0
    %v770 = vadd.f32 0.0, %v769
    %v771 = vpop.f32.mrf.mxu0
    %v772 = vadd.f32 0.0, %v771
    %773 = vdwg.mxu0
    %v774 = vadd.f32 %v628, %v699
    %v775 = vadd.f32 %v629, %v701
    %v776 = vadd.f32 %v630, %v770
    %v777 = vadd.f32 %v631, %v772
    %v778 = vxor.u32 %v774, 2147483648
    %v779 = vmul.f32 %v778, 1.442695
    %v780 = vpow.pop %v779
    %v781 = vadd.f32 %v780, 1.0
    %v782 = vrcp.pop %v781
    %v783 = vmul.f32 1.0, %v782
    %v784 = vxor.u32 %v775, 2147483648
    %v785 = vmul.f32 %v784, 1.442695
    %v786 = vpow.pop %v785
    %v787 = vadd.f32 %v786, 1.0
    %v788 = vrcp.pop %v787
    %v789 = vmul.f32 1.0, %v788
    %v790 = vtanh.pop %v776
    %v791 = vxor.u32 %v777, 2147483648
    %v792 = vmul.f32 %v791, 1.442695
    %v793 = vpow.pop %v792
    %v794 = vadd.f32 %v793, 1.0
    %v795 = vrcp.pop %v794
    %v796 = vmul.f32 1.0, %v795
    %v797 = vmul.f32 %v789, %v622
    %v798 = vmul.f32 %v783, %v790
    %v799 = vadd.f32 %v797, %v798
    %v800 = vtanh.pop %v799
    %v801 = vmul.f32 %v796, %v800
    %s802 = smul.u32 2, 4
    %s803 = smul.addr %s802, 8
    %s804 = scalar_lea.vmem [#allocation2], %s803
    %v805 = vld [vmem:[%s804] sm:$0xff]
    %v806 = vld [vmem:[%s804 + $0x8] sm:$0xff]
    %v807 = vld [vmem:[%s804 + $0x10] sm:$0xff]
    %v808 = vld [vmem:[%s804 + $0x18] sm:$0xff]
    %809 = vmatprep.subr.mxu0 %v452
    %810 = vmatpush1.msra.mxu0 %v451
    %811 = vmatprep.subr.mxu0 %v448
    %812 = vmatpush1.msra.mxu0 %v447
    %813 = vmatprep.subr.mxu0 %v444
    %814 = vmatpush1.msra.mxu0 %v443
    %815 = vmatprep.subr.mxu0 %v440
    %816 = vmatpush1.msra.mxu0 %v439
    %817 = vmatprep.subr.mxu0 %v436
    %818 = vmatpush1.msra.mxu0 %v435
    %819 = vmatprep.subr.mxu0 %v432
    %820 = vmatpush1.msra.mxu0 %v431
    %821 = vmatprep.subr.mxu0 %v428
    %822 = vmatpush1.msra.mxu0 %v427
    %823 = vmatprep.subr.mxu0 %v424
    %824 = vmatpush1.msra.mxu0 %v423
    %825 = vmatprep.subr.mxu0 %v420
    %826 = vmatpush1.msra.mxu0 %v419
    %827 = vmatprep.subr.mxu0 %v416
    %828 = vmatpush1.msra.mxu0 %v415
    %829 = vmatprep.subr.mxu0 %v412
    %830 = vmatpush1.msra.mxu0 %v411
    %831 = vmatprep.subr.mxu0 %v408
    %832 = vmatpush1.msra.mxu0 %v407
    %833 = vmatprep.subr.mxu0 %v404
    %834 = vmatpush1.msra.mxu0 %v403
    %835 = vmatprep.subr.mxu0 %v400
    %836 = vmatpush1.msra.mxu0 %v399
    %837 = vmatprep.subr.mxu0 %v396
    %838 = vmatpush1.msra.mxu0 %v395
    %839 = vmatprep.subr.mxu0 %v392
    %840 = vmatpush1.msra.mxu0 %v391
    %841 = vmatprep.subr.mxu0 0.0
    %842 = vmatpush2.msra.mxu0 0.0
    %843 = vmatprep.subr.mxu0 0.0
    %844 = vmatpush2.msra.mxu0 0.0
    %845 = vmatprep.subr.mxu0 0.0
    %846 = vmatpush2.msra.mxu0 0.0
    %847 = vmatprep.subr.mxu0 0.0
    %848 = vmatpush2.msra.mxu0 0.0
    %849 = vmatprep.subr.mxu0 0.0
    %850 = vmatpush2.msra.mxu0 0.0
    %851 = vmatprep.subr.mxu0 0.0
    %852 = vmatpush2.msra.mxu0 0.0
    %853 = vmatprep.subr.mxu0 0.0
    %854 = vmatpush2.msra.mxu0 0.0
    %855 = vmatprep.subr.mxu0 0.0
    %856 = vmatpush2.msra.mxu0 0.0
    %857 = vmatprep.subr.mxu0 0.0
    %858 = vmatpush2.msra.mxu0 0.0
    %859 = vmatprep.subr.mxu0 0.0
    %860 = vmatpush2.msra.mxu0 0.0
    %861 = vmatprep.subr.mxu0 0.0
    %862 = vmatpush2.msra.mxu0 0.0
    %863 = vmatprep.subr.mxu0 0.0
    %864 = vmatpush2.msra.mxu0 0.0
    %865 = vmatprep.subr.mxu0 0.0
    %866 = vmatpush2.msra.mxu0 0.0
    %867 = vmatprep.subr.mxu0 0.0
    %868 = vmatpush2.msra.mxu0 0.0
    %869 = vmatprep.subr.mxu0 0.0
    %870 = vmatpush2.msra.mxu0 0.0
    %871 = vmatprep.subr.mxu0 0.0
    %872 = vmatpush2.msra.mxu0 0.0
    %873 = vmatprep.mubr.f32.mxu0 0.0
    %874 = vmatmul.mubr.f32.gmra.mxu0 %v801
    %v875 = vpop.f32.mrf.mxu0
    %v876 = vadd.f32 0.0, %v875
    %v877 = vpop.f32.mrf.mxu0
    %v878 = vadd.f32 0.0, %v877
    %879 = vdwg.mxu0
    %880 = vmatprep.subr.mxu0 %v454
    %881 = vmatpush1.msra.mxu0 %v453
    %882 = vmatprep.subr.mxu0 %v450
    %883 = vmatpush1.msra.mxu0 %v449
    %884 = vmatprep.subr.mxu0 %v446
    %885 = vmatpush1.msra.mxu0 %v445
    %886 = vmatprep.subr.mxu0 %v442
    %887 = vmatpush1.msra.mxu0 %v441
    %888 = vmatprep.subr.mxu0 %v438
    %889 = vmatpush1.msra.mxu0 %v437
    %890 = vmatprep.subr.mxu0 %v434
    %891 = vmatpush1.msra.mxu0 %v433
    %892 = vmatprep.subr.mxu0 %v430
    %893 = vmatpush1.msra.mxu0 %v429
    %894 = vmatprep.subr.mxu0 %v426
    %895 = vmatpush1.msra.mxu0 %v425
    %896 = vmatprep.subr.mxu0 %v422
    %897 = vmatpush1.msra.mxu0 %v421
    %898 = vmatprep.subr.mxu0 %v418
    %899 = vmatpush1.msra.mxu0 %v417
    %900 = vmatprep.subr.mxu0 %v414
    %901 = vmatpush1.msra.mxu0 %v413
    %902 = vmatprep.subr.mxu0 %v410
    %903 = vmatpush1.msra.mxu0 %v409
    %904 = vmatprep.subr.mxu0 %v406
    %905 = vmatpush1.msra.mxu0 %v405
    %906 = vmatprep.subr.mxu0 %v402
    %907 = vmatpush1.msra.mxu0 %v401
    %908 = vmatprep.subr.mxu0 %v398
    %909 = vmatpush1.msra.mxu0 %v397
    %910 = vmatprep.subr.mxu0 %v394
    %911 = vmatpush1.msra.mxu0 %v393
    %912 = vmatprep.subr.mxu0 0.0
    %913 = vmatpush2.msra.mxu0 0.0
    %914 = vmatprep.subr.mxu0 0.0
    %915 = vmatpush2.msra.mxu0 0.0
    %916 = vmatprep.subr.mxu0 0.0
    %917 = vmatpush2.msra.mxu0 0.0
    %918 = vmatprep.subr.mxu0 0.0
    %919 = vmatpush2.msra.mxu0 0.0
    %920 = vmatprep.subr.mxu0 0.0
    %921 = vmatpush2.msra.mxu0 0.0
    %922 = vmatprep.subr.mxu0 0.0
    %923 = vmatpush2.msra.mxu0 0.0
    %924 = vmatprep.subr.mxu0 0.0
    %925 = vmatpush2.msra.mxu0 0.0
    %926 = vmatprep.subr.mxu0 0.0
    %927 = vmatpush2.msra.mxu0 0.0
    %928 = vmatprep.subr.mxu0 0.0
    %929 = vmatpush2.msra.mxu0 0.0
    %930 = vmatprep.subr.mxu0 0.0
    %931 = vmatpush2.msra.mxu0 0.0
    %932 = vmatprep.subr.mxu0 0.0
    %933 = vmatpush2.msra.mxu0 0.0
    %934 = vmatprep.subr.mxu0 0.0
    %935 = vmatpush2.msra.mxu0 0.0
    %936 = vmatprep.subr.mxu0 0.0
    %937 = vmatpush2.msra.mxu0 0.0
    %938 = vmatprep.subr.mxu0 0.0
    %939 = vmatpush2.msra.mxu0 0.0
    %940 = vmatprep.subr.mxu0 0.0
    %941 = vmatpush2.msra.mxu0 0.0
    %942 = vmatprep.subr.mxu0 0.0
    %943 = vmatpush2.msra.mxu0 0.0
    %944 = vmatprep.mubr.f32.mxu0 0.0
    %945 = vmatmul.mubr.f32.gmra.mxu0 %v801
    %v946 = vpop.f32.mrf.mxu0
    %v947 = vadd.f32 0.0, %v946
    %v948 = vpop.f32.mrf.mxu0
    %v949 = vadd.f32 0.0, %v948
    %950 = vdwg.mxu0
    %v951 = vadd.f32 %v805, %v876
    %v952 = vadd.f32 %v806, %v878
    %v953 = vadd.f32 %v807, %v947
    %v954 = vadd.f32 %v808, %v949
    %v955 = vxor.u32 %v951, 2147483648
    %v956 = vmul.f32 %v955, 1.442695
    %v957 = vpow.pop %v956
    %v958 = vadd.f32 %v957, 1.0
    %v959 = vrcp.pop %v958
    %v960 = vmul.f32 1.0, %v959
    %v961 = vxor.u32 %v952, 2147483648
    %v962 = vmul.f32 %v961, 1.442695
    %v963 = vpow.pop %v962
    %v964 = vadd.f32 %v963, 1.0
    %v965 = vrcp.pop %v964
    %v966 = vmul.f32 1.0, %v965
    %v967 = vtanh.pop %v953
    %v968 = vxor.u32 %v954, 2147483648
    %v969 = vmul.f32 %v968, 1.442695
    %v970 = vpow.pop %v969
    %v971 = vadd.f32 %v970, 1.0
    %v972 = vrcp.pop %v971
    %v973 = vmul.f32 1.0, %v972
    %v974 = vmul.f32 %v966, %v799
    %v975 = vmul.f32 %v960, %v967
    %v976 = vadd.f32 %v974, %v975
    %v977 = vtanh.pop %v976
    %v978 = vmul.f32 %v973, %v977
    %s979 = smul.u32 3, 4
    %s980 = smul.addr %s979, 8
    %s981 = scalar_lea.vmem [#allocation2], %s980
    %v982 = vld [vmem:[%s981] sm:$0xff]
    %v983 = vld [vmem:[%s981 + $0x8] sm:$0xff]
    %v984 = vld [vmem:[%s981 + $0x10] sm:$0xff]
    %v985 = vld [vmem:[%s981 + $0x18] sm:$0xff]
    %986 = vmatprep.subr.mxu0 %v452
    %987 = vmatpush1.msra.mxu0 %v451
    %988 = vmatprep.subr.mxu0 %v448
    %989 = vmatpush1.msra.mxu0 %v447
    %990 = vmatprep.subr.mxu0 %v444
    %991 = vmatpush1.msra.mxu0 %v443
    %992 = vmatprep.subr.mxu0 %v440
    %993 = vmatpush1.msra.mxu0 %v439
    %994 = vmatprep.subr.mxu0 %v436
    %995 = vmatpush1.msra.mxu0 %v435
    %996 = vmatprep.subr.mxu0 %v432
    %997 = vmatpush1.msra.mxu0 %v431
    %998 = vmatprep.subr.mxu0 %v428
    %999 = vmatpush1.msra.mxu0 %v427
    %1000 = vmatprep.subr.mxu0 %v424
    %1001 = vmatpush1.msra.mxu0 %v423
    %1002 = vmatprep.subr.mxu0 %v420
    %1003 = vmatpush1.msra.mxu0 %v419
    %1004 = vmatprep.subr.mxu0 %v416
    %1005 = vmatpush1.msra.mxu0 %v415
    %1006 = vmatprep.subr.mxu0 %v412
    %1007 = vmatpush1.msra.mxu0 %v411
    %1008 = vmatprep.subr.mxu0 %v408
    %1009 = vmatpush1.msra.mxu0 %v407
    %1010 = vmatprep.subr.mxu0 %v404
    %1011 = vmatpush1.msra.mxu0 %v403
    %1012 = vmatprep.subr.mxu0 %v400
    %1013 = vmatpush1.msra.mxu0 %v399
    %1014 = vmatprep.subr.mxu0 %v396
    %1015 = vmatpush1.msra.mxu0 %v395
    %1016 = vmatprep.subr.mxu0 %v392
    %1017 = vmatpush1.msra.mxu0 %v391
    %1018 = vmatprep.subr.mxu0 0.0
    %1019 = vmatpush2.msra.mxu0 0.0
    %1020 = vmatprep.subr.mxu0 0.0
    %1021 = vmatpush2.msra.mxu0 0.0
    %1022 = vmatprep.subr.mxu0 0.0
    %1023 = vmatpush2.msra.mxu0 0.0
    %1024 = vmatprep.subr.mxu0 0.0
    %1025 = vmatpush2.msra.mxu0 0.0
    %1026 = vmatprep.subr.mxu0 0.0
    %1027 = vmatpush2.msra.mxu0 0.0
    %1028 = vmatprep.subr.mxu0 0.0
    %1029 = vmatpush2.msra.mxu0 0.0
    %1030 = vmatprep.subr.mxu0 0.0
    %1031 = vmatpush2.msra.mxu0 0.0
    %1032 = vmatprep.subr.mxu0 0.0
    %1033 = vmatpush2.msra.mxu0 0.0
    %1034 = vmatprep.subr.mxu0 0.0
    %1035 = vmatpush2.msra.mxu0 0.0
    %1036 = vmatprep.subr.mxu0 0.0
    %1037 = vmatpush2.msra.mxu0 0.0
    %1038 = vmatprep.subr.mxu0 0.0
    %1039 = vmatpush2.msra.mxu0 0.0
    %1040 = vmatprep.subr.mxu0 0.0
    %1041 = vmatpush2.msra.mxu0 0.0
    %1042 = vmatprep.subr.mxu0 0.0
    %1043 = vmatpush2.msra.mxu0 0.0
    %1044 = vmatprep.subr.mxu0 0.0
    %1045 = vmatpush2.msra.mxu0 0.0
    %1046 = vmatprep.subr.mxu0 0.0
    %1047 = vmatpush2.msra.mxu0 0.0
    %1048 = vmatprep.subr.mxu0 0.0
    %1049 = vmatpush2.msra.mxu0 0.0
    %1050 = vmatprep.mubr.f32.mxu0 0.0
    %1051 = vmatmul.mubr.f32.gmra.mxu0 %v978
    %v1052 = vpop.f32.mrf.mxu0
    %v1053 = vadd.f32 0.0, %v1052
    %v1054 = vpop.f32.mrf.mxu0
    %v1055 = vadd.f32 0.0, %v1054
    %1056 = vdwg.mxu0
    %1057 = vmatprep.subr.mxu0 %v454
    %1058 = vmatpush1.msra.mxu0 %v453
    %1059 = vmatprep.subr.mxu0 %v450
    %1060 = vmatpush1.msra.mxu0 %v449
    %1061 = vmatprep.subr.mxu0 %v446
    %1062 = vmatpush1.msra.mxu0 %v445
    %1063 = vmatprep.subr.mxu0 %v442
    %1064 = vmatpush1.msra.mxu0 %v441
    %1065 = vmatprep.subr.mxu0 %v438
    %1066 = vmatpush1.msra.mxu0 %v437
    %1067 = vmatprep.subr.mxu0 %v434
    %1068 = vmatpush1.msra.mxu0 %v433
    %1069 = vmatprep.subr.mxu0 %v430
    %1070 = vmatpush1.msra.mxu0 %v429
    %1071 = vmatprep.subr.mxu0 %v426
    %1072 = vmatpush1.msra.mxu0 %v425
    %1073 = vmatprep.subr.mxu0 %v422
    %1074 = vmatpush1.msra.mxu0 %v421
    %1075 = vmatprep.subr.mxu0 %v418
    %1076 = vmatpush1.msra.mxu0 %v417
    %1077 = vmatprep.subr.mxu0 %v414
    %1078 = vmatpush1.msra.mxu0 %v413
    %1079 = vmatprep.subr.mxu0 %v410
    %1080 = vmatpush1.msra.mxu0 %v409
    %1081 = vmatprep.subr.mxu0 %v406
    %1082 = vmatpush1.msra.mxu0 %v405
    %1083 = vmatprep.subr.mxu0 %v402
    %1084 = vmatpush1.msra.mxu0 %v401
    %1085 = vmatprep.subr.mxu0 %v398
    %1086 = vmatpush1.msra.mxu0 %v397
    %1087 = vmatprep.subr.mxu0 %v394
    %1088 = vmatpush1.msra.mxu0 %v393
    %1089 = vmatprep.subr.mxu0 0.0
    %1090 = vmatpush2.msra.mxu0 0.0
    %1091 = vmatprep.subr.mxu0 0.0
    %1092 = vmatpush2.msra.mxu0 0.0
    %1093 = vmatprep.subr.mxu0 0.0
    %1094 = vmatpush2.msra.mxu0 0.0
    %1095 = vmatprep.subr.mxu0 0.0
    %1096 = vmatpush2.msra.mxu0 0.0
    %1097 = vmatprep.subr.mxu0 0.0
    %1098 = vmatpush2.msra.mxu0 0.0
    %1099 = vmatprep.subr.mxu0 0.0
    %1100 = vmatpush2.msra.mxu0 0.0
    %1101 = vmatprep.subr.mxu0 0.0
    %1102 = vmatpush2.msra.mxu0 0.0
    %1103 = vmatprep.subr.mxu0 0.0
    %1104 = vmatpush2.msra.mxu0 0.0
    %1105 = vmatprep.subr.mxu0 0.0
    %1106 = vmatpush2.msra.mxu0 0.0
    %1107 = vmatprep.subr.mxu0 0.0
    %1108 = vmatpush2.msra.mxu0 0.0
    %1109 = vmatprep.subr.mxu0 0.0
    %1110 = vmatpush2.msra.mxu0 0.0
    %1111 = vmatprep.subr.mxu0 0.0
    %1112 = vmatpush2.msra.mxu0 0.0
    %1113 = vmatprep.subr.mxu0 0.0
    %1114 = vmatpush2.msra.mxu0 0.0
    %1115 = vmatprep.subr.mxu0 0.0
    %1116 = vmatpush2.msra.mxu0 0.0
    %1117 = vmatprep.subr.mxu0 0.0
    %1118 = vmatpush2.msra.mxu0 0.0
    %1119 = vmatprep.subr.mxu0 0.0
    %1120 = vmatpush2.msra.mxu0 0.0
    %1121 = vmatprep.mubr.f32.mxu0 0.0
    %1122 = vmatmul.mubr.f32.gmra.mxu0 %v978
    %v1123 = vpop.f32.mrf.mxu0
    %v1124 = vadd.f32 0.0, %v1123
    %v1125 = vpop.f32.mrf.mxu0
    %v1126 = vadd.f32 0.0, %v1125
    %1127 = vdwg.mxu0
    %v1128 = vadd.f32 %v982, %v1053
    %v1129 = vadd.f32 %v983, %v1055
    %v1130 = vadd.f32 %v984, %v1124
    %v1131 = vadd.f32 %v985, %v1126
    %v1132 = vxor.u32 %v1128, 2147483648
    %v1133 = vmul.f32 %v1132, 1.442695
    %v1134 = vpow.pop %v1133
    %v1135 = vadd.f32 %v1134, 1.0
    %v1136 = vrcp.pop %v1135
    %v1137 = vmul.f32 1.0, %v1136
    %v1138 = vxor.u32 %v1129, 2147483648
    %v1139 = vmul.f32 %v1138, 1.442695
    %v1140 = vpow.pop %v1139
    %v1141 = vadd.f32 %v1140, 1.0
    %v1142 = vrcp.pop %v1141
    %v1143 = vmul.f32 1.0, %v1142
    %v1144 = vtanh.pop %v1130
    %v1145 = vxor.u32 %v1131, 2147483648
    %v1146 = vmul.f32 %v1145, 1.442695
    %v1147 = vpow.pop %v1146
    %v1148 = vadd.f32 %v1147, 1.0
    %v1149 = vrcp.pop %v1148
    %v1150 = vmul.f32 1.0, %v1149
    %v1151 = vmul.f32 %v1143, %v976
    %v1152 = vmul.f32 %v1137, %v1144
    %v1153 = vadd.f32 %v1151, %v1152
    %v1154 = vtanh.pop %v1153
    %v1155 = vmul.f32 %v1150, %v1154
    %s1156 = smul.u32 4, 4
    %s1157 = smul.addr %s1156, 8
    %s1158 = scalar_lea.vmem [#allocation2], %s1157
    %v1159 = vld [vmem:[%s1158] sm:$0xff]
    %v1160 = vld [vmem:[%s1158 + $0x8] sm:$0xff]
    %v1161 = vld [vmem:[%s1158 + $0x10] sm:$0xff]
    %v1162 = vld [vmem:[%s1158 + $0x18] sm:$0xff]
    %1163 = vmatprep.subr.mxu0 %v452
    %1164 = vmatpush1.msra.mxu0 %v451
    %1165 = vmatprep.subr.mxu0 %v448
    %1166 = vmatpush1.msra.mxu0 %v447
    %1167 = vmatprep.subr.mxu0 %v444
    %1168 = vmatpush1.msra.mxu0 %v443
    %1169 = vmatprep.subr.mxu0 %v440
    %1170 = vmatpush1.msra.mxu0 %v439
    %1171 = vmatprep.subr.mxu0 %v436
    %1172 = vmatpush1.msra.mxu0 %v435
    %1173 = vmatprep.subr.mxu0 %v432
    %1174 = vmatpush1.msra.mxu0 %v431
    %1175 = vmatprep.subr.mxu0 %v428
    %1176 = vmatpush1.msra.mxu0 %v427
    %1177 = vmatprep.subr.mxu0 %v424
    %1178 = vmatpush1.msra.mxu0 %v423
    %1179 = vmatprep.subr.mxu0 %v420
    %1180 = vmatpush1.msra.mxu0 %v419
    %1181 = vmatprep.subr.mxu0 %v416
    %1182 = vmatpush1.msra.mxu0 %v415
    %1183 = vmatprep.subr.mxu0 %v412
    %1184 = vmatpush1.msra.mxu0 %v411
    %1185 = vmatprep.subr.mxu0 %v408
    %1186 = vmatpush1.msra.mxu0 %v407
    %1187 = vmatprep.subr.mxu0 %v404
    %1188 = vmatpush1.msra.mxu0 %v403
    %1189 = vmatprep.subr.mxu0 %v400
    %1190 = vmatpush1.msra.mxu0 %v399
    %1191 = vmatprep.subr.mxu0 %v396
    %1192 = vmatpush1.msra.mxu0 %v395
    %1193 = vmatprep.subr.mxu0 %v392
    %1194 = vmatpush1.msra.mxu0 %v391
    %1195 = vmatprep.subr.mxu0 0.0
    %1196 = vmatpush2.msra.mxu0 0.0
    %1197 = vmatprep.subr.mxu0 0.0
    %1198 = vmatpush2.msra.mxu0 0.0
    %1199 = vmatprep.subr.mxu0 0.0
    %1200 = vmatpush2.msra.mxu0 0.0
    %1201 = vmatprep.subr.mxu0 0.0
    %1202 = vmatpush2.msra.mxu0 0.0
    %1203 = vmatprep.subr.mxu0 0.0
    %1204 = vmatpush2.msra.mxu0 0.0
    %1205 = vmatprep.subr.mxu0 0.0
    %1206 = vmatpush2.msra.mxu0 0.0
    %1207 = vmatprep.subr.mxu0 0.0
    %1208 = vmatpush2.msra.mxu0 0.0
    %1209 = vmatprep.subr.mxu0 0.0
    %1210 = vmatpush2.msra.mxu0 0.0
    %1211 = vmatprep.subr.mxu0 0.0
    %1212 = vmatpush2.msra.mxu0 0.0
    %1213 = vmatprep.subr.mxu0 0.0
    %1214 = vmatpush2.msra.mxu0 0.0
    %1215 = vmatprep.subr.mxu0 0.0
    %1216 = vmatpush2.msra.mxu0 0.0
    %1217 = vmatprep.subr.mxu0 0.0
    %1218 = vmatpush2.msra.mxu0 0.0
    %1219 = vmatprep.subr.mxu0 0.0
    %1220 = vmatpush2.msra.mxu0 0.0
    %1221 = vmatprep.subr.mxu0 0.0
    %1222 = vmatpush2.msra.mxu0 0.0
    %1223 = vmatprep.subr.mxu0 0.0
    %1224 = vmatpush2.msra.mxu0 0.0
    %1225 = vmatprep.subr.mxu0 0.0
    %1226 = vmatpush2.msra.mxu0 0.0
    %1227 = vmatprep.mubr.f32.mxu0 0.0
    %1228 = vmatmul.mubr.f32.gmra.mxu0 %v1155
    %v1229 = vpop.f32.mrf.mxu0
    %v1230 = vadd.f32 0.0, %v1229
    %v1231 = vpop.f32.mrf.mxu0
    %v1232 = vadd.f32 0.0, %v1231
    %1233 = vdwg.mxu0
    %1234 = vmatprep.subr.mxu0 %v454
    %1235 = vmatpush1.msra.mxu0 %v453
    %1236 = vmatprep.subr.mxu0 %v450
    %1237 = vmatpush1.msra.mxu0 %v449
    %1238 = vmatprep.subr.mxu0 %v446
    %1239 = vmatpush1.msra.mxu0 %v445
    %1240 = vmatprep.subr.mxu0 %v442
    %1241 = vmatpush1.msra.mxu0 %v441
    %1242 = vmatprep.subr.mxu0 %v438
    %1243 = vmatpush1.msra.mxu0 %v437
    %1244 = vmatprep.subr.mxu0 %v434
    %1245 = vmatpush1.msra.mxu0 %v433
    %1246 = vmatprep.subr.mxu0 %v430
    %1247 = vmatpush1.msra.mxu0 %v429
    %1248 = vmatprep.subr.mxu0 %v426
    %1249 = vmatpush1.msra.mxu0 %v425
    %1250 = vmatprep.subr.mxu0 %v422
    %1251 = vmatpush1.msra.mxu0 %v421
    %1252 = vmatprep.subr.mxu0 %v418
    %1253 = vmatpush1.msra.mxu0 %v417
    %1254 = vmatprep.subr.mxu0 %v414
    %1255 = vmatpush1.msra.mxu0 %v413
    %1256 = vmatprep.subr.mxu0 %v410
    %1257 = vmatpush1.msra.mxu0 %v409
    %1258 = vmatprep.subr.mxu0 %v406
    %1259 = vmatpush1.msra.mxu0 %v405
    %1260 = vmatprep.subr.mxu0 %v402
    %1261 = vmatpush1.msra.mxu0 %v401
    %1262 = vmatprep.subr.mxu0 %v398
    %1263 = vmatpush1.msra.mxu0 %v397
    %1264 = vmatprep.subr.mxu0 %v394
    %1265 = vmatpush1.msra.mxu0 %v393
    %1266 = vmatprep.subr.mxu0 0.0
    %1267 = vmatpush2.msra.mxu0 0.0
    %1268 = vmatprep.subr.mxu0 0.0
    %1269 = vmatpush2.msra.mxu0 0.0
    %1270 = vmatprep.subr.mxu0 0.0
    %1271 = vmatpush2.msra.mxu0 0.0
    %1272 = vmatprep.subr.mxu0 0.0
    %1273 = vmatpush2.msra.mxu0 0.0
    %1274 = vmatprep.subr.mxu0 0.0
    %1275 = vmatpush2.msra.mxu0 0.0
    %1276 = vmatprep.subr.mxu0 0.0
    %1277 = vmatpush2.msra.mxu0 0.0
    %1278 = vmatprep.subr.mxu0 0.0
    %1279 = vmatpush2.msra.mxu0 0.0
    %1280 = vmatprep.subr.mxu0 0.0
    %1281 = vmatpush2.msra.mxu0 0.0
    %1282 = vmatprep.subr.mxu0 0.0
    %1283 = vmatpush2.msra.mxu0 0.0
    %1284 = vmatprep.subr.mxu0 0.0
    %1285 = vmatpush2.msra.mxu0 0.0
    %1286 = vmatprep.subr.mxu0 0.0
    %1287 = vmatpush2.msra.mxu0 0.0
    %1288 = vmatprep.subr.mxu0 0.0
    %1289 = vmatpush2.msra.mxu0 0.0
    %1290 = vmatprep.subr.mxu0 0.0
    %1291 = vmatpush2.msra.mxu0 0.0
    %1292 = vmatprep.subr.mxu0 0.0
    %1293 = vmatpush2.msra.mxu0 0.0
    %1294 = vmatprep.subr.mxu0 0.0
    %1295 = vmatpush2.msra.mxu0 0.0
    %1296 = vmatprep.subr.mxu0 0.0
    %1297 = vmatpush2.msra.mxu0 0.0
    %1298 = vmatprep.mubr.f32.mxu0 0.0
    %1299 = vmatmul.mubr.f32.gmra.mxu0 %v1155
    %v1300 = vpop.f32.mrf.mxu0
    %v1301 = vadd.f32 0.0, %v1300
    %v1302 = vpop.f32.mrf.mxu0
    %v1303 = vadd.f32 0.0, %v1302
    %1304 = vdwg.mxu0
    %v1305 = vadd.f32 %v1159, %v1230
    %v1306 = vadd.f32 %v1160, %v1232
    %v1307 = vadd.f32 %v1161, %v1301
    %v1308 = vadd.f32 %v1162, %v1303
    %v1309 = vxor.u32 %v1305, 2147483648
    %v1310 = vmul.f32 %v1309, 1.442695
    %v1311 = vpow.pop %v1310
    %v1312 = vadd.f32 %v1311, 1.0
    %v1313 = vrcp.pop %v1312
    %v1314 = vmul.f32 1.0, %v1313
    %v1315 = vxor.u32 %v1306, 2147483648
    %v1316 = vmul.f32 %v1315, 1.442695
    %v1317 = vpow.pop %v1316
    %v1318 = vadd.f32 %v1317, 1.0
    %v1319 = vrcp.pop %v1318
    %v1320 = vmul.f32 1.0, %v1319
    %v1321 = vtanh.pop %v1307
    %v1322 = vxor.u32 %v1308, 2147483648
    %v1323 = vmul.f32 %v1322, 1.442695
    %v1324 = vpow.pop %v1323
    %v1325 = vadd.f32 %v1324, 1.0
    %v1326 = vrcp.pop %v1325
    %v1327 = vmul.f32 1.0, %v1326
    %v1328 = vmul.f32 %v1320, %v1153
    %v1329 = vmul.f32 %v1314, %v1321
    %v1330 = vadd.f32 %v1328, %v1329
    %v1331 = vtanh.pop %v1330
    %v1332 = vmul.f32 %v1327, %v1331
    %s1333 = smul.u32 5, 4
    %s1334 = smul.addr %s1333, 8
    %s1335 = scalar_lea.vmem [#allocation2], %s1334
    %v1336 = vld [vmem:[%s1335] sm:$0xff]
    %v1337 = vld [vmem:[%s1335 + $0x8] sm:$0xff]
    %v1338 = vld [vmem:[%s1335 + $0x10] sm:$0xff]
    %v1339 = vld [vmem:[%s1335 + $0x18] sm:$0xff]
    %1340 = vmatprep.subr.mxu0 %v452
    %1341 = vmatpush1.msra.mxu0 %v451
    %1342 = vmatprep.subr.mxu0 %v448
    %1343 = vmatpush1.msra.mxu0 %v447
    %1344 = vmatprep.subr.mxu0 %v444
    %1345 = vmatpush1.msra.mxu0 %v443
    %1346 = vmatprep.subr.mxu0 %v440
    %1347 = vmatpush1.msra.mxu0 %v439
    %1348 = vmatprep.subr.mxu0 %v436
    %1349 = vmatpush1.msra.mxu0 %v435
    %1350 = vmatprep.subr.mxu0 %v432
    %1351 = vmatpush1.msra.mxu0 %v431
    %1352 = vmatprep.subr.mxu0 %v428
    %1353 = vmatpush1.msra.mxu0 %v427
    %1354 = vmatprep.subr.mxu0 %v424
    %1355 = vmatpush1.msra.mxu0 %v423
    %1356 = vmatprep.subr.mxu0 %v420
    %1357 = vmatpush1.msra.mxu0 %v419
    %1358 = vmatprep.subr.mxu0 %v416
    %1359 = vmatpush1.msra.mxu0 %v415
    %1360 = vmatprep.subr.mxu0 %v412
    %1361 = vmatpush1.msra.mxu0 %v411
    %1362 = vmatprep.subr.mxu0 %v408
    %1363 = vmatpush1.msra.mxu0 %v407
    %1364 = vmatprep.subr.mxu0 %v404
    %1365 = vmatpush1.msra.mxu0 %v403
    %1366 = vmatprep.subr.mxu0 %v400
    %1367 = vmatpush1.msra.mxu0 %v399
    %1368 = vmatprep.subr.mxu0 %v396
    %1369 = vmatpush1.msra.mxu0 %v395
    %1370 = vmatprep.subr.mxu0 %v392
    %1371 = vmatpush1.msra.mxu0 %v391
    %1372 = vmatprep.subr.mxu0 0.0
    %1373 = vmatpush2.msra.mxu0 0.0
    %1374 = vmatprep.subr.mxu0 0.0
    %1375 = vmatpush2.msra.mxu0 0.0
    %1376 = vmatprep.subr.mxu0 0.0
    %1377 = vmatpush2.msra.mxu0 0.0
    %1378 = vmatprep.subr.mxu0 0.0
    %1379 = vmatpush2.msra.mxu0 0.0
    %1380 = vmatprep.subr.mxu0 0.0
    %1381 = vmatpush2.msra.mxu0 0.0
    %1382 = vmatprep.subr.mxu0 0.0
    %1383 = vmatpush2.msra.mxu0 0.0
    %1384 = vmatprep.subr.mxu0 0.0
    %1385 = vmatpush2.msra.mxu0 0.0
    %1386 = vmatprep.subr.mxu0 0.0
    %1387 = vmatpush2.msra.mxu0 0.0
    %1388 = vmatprep.subr.mxu0 0.0
    %1389 = vmatpush2.msra.mxu0 0.0
    %1390 = vmatprep.subr.mxu0 0.0
    %1391 = vmatpush2.msra.mxu0 0.0
    %1392 = vmatprep.subr.mxu0 0.0
    %1393 = vmatpush2.msra.mxu0 0.0
    %1394 = vmatprep.subr.mxu0 0.0
    %1395 = vmatpush2.msra.mxu0 0.0
    %1396 = vmatprep.subr.mxu0 0.0
    %1397 = vmatpush2.msra.mxu0 0.0
    %1398 = vmatprep.subr.mxu0 0.0
    %1399 = vmatpush2.msra.mxu0 0.0
    %1400 = vmatprep.subr.mxu0 0.0
    %1401 = vmatpush2.msra.mxu0 0.0
    %1402 = vmatprep.subr.mxu0 0.0
    %1403 = vmatpush2.msra.mxu0 0.0
    %1404 = vmatprep.mubr.f32.mxu0 0.0
    %1405 = vmatmul.mubr.f32.gmra.mxu0 %v1332
    %v1406 = vpop.f32.mrf.mxu0
    %v1407 = vadd.f32 0.0, %v1406
    %v1408 = vpop.f32.mrf.mxu0
    %v1409 = vadd.f32 0.0, %v1408
    %1410 = vdwg.mxu0
    %1411 = vmatprep.subr.mxu0 %v454
    %1412 = vmatpush1.msra.mxu0 %v453
    %1413 = vmatprep.subr.mxu0 %v450
    %1414 = vmatpush1.msra.mxu0 %v449
    %1415 = vmatprep.subr.mxu0 %v446
    %1416 = vmatpush1.msra.mxu0 %v445
    %1417 = vmatprep.subr.mxu0 %v442
    %1418 = vmatpush1.msra.mxu0 %v441
    %1419 = vmatprep.subr.mxu0 %v438
    %1420 = vmatpush1.msra.mxu0 %v437
    %1421 = vmatprep.subr.mxu0 %v434
    %1422 = vmatpush1.msra.mxu0 %v433
    %1423 = vmatprep.subr.mxu0 %v430
    %1424 = vmatpush1.msra.mxu0 %v429
    %1425 = vmatprep.subr.mxu0 %v426
    %1426 = vmatpush1.msra.mxu0 %v425
    %1427 = vmatprep.subr.mxu0 %v422
    %1428 = vmatpush1.msra.mxu0 %v421
    %1429 = vmatprep.subr.mxu0 %v418
    %1430 = vmatpush1.msra.mxu0 %v417
    %1431 = vmatprep.subr.mxu0 %v414
    %1432 = vmatpush1.msra.mxu0 %v413
    %1433 = vmatprep.subr.mxu0 %v410
    %1434 = vmatpush1.msra.mxu0 %v409
    %1435 = vmatprep.subr.mxu0 %v406
    %1436 = vmatpush1.msra.mxu0 %v405
    %1437 = vmatprep.subr.mxu0 %v402
    %1438 = vmatpush1.msra.mxu0 %v401
    %1439 = vmatprep.subr.mxu0 %v398
    %1440 = vmatpush1.msra.mxu0 %v397
    %1441 = vmatprep.subr.mxu0 %v394
    %1442 = vmatpush1.msra.mxu0 %v393
    %1443 = vmatprep.subr.mxu0 0.0
    %1444 = vmatpush2.msra.mxu0 0.0
    %1445 = vmatprep.subr.mxu0 0.0
    %1446 = vmatpush2.msra.mxu0 0.0
    %1447 = vmatprep.subr.mxu0 0.0
    %1448 = vmatpush2.msra.mxu0 0.0
    %1449 = vmatprep.subr.mxu0 0.0
    %1450 = vmatpush2.msra.mxu0 0.0
    %1451 = vmatprep.subr.mxu0 0.0
    %1452 = vmatpush2.msra.mxu0 0.0
    %1453 = vmatprep.subr.mxu0 0.0
    %1454 = vmatpush2.msra.mxu0 0.0
    %1455 = vmatprep.subr.mxu0 0.0
    %1456 = vmatpush2.msra.mxu0 0.0
    %1457 = vmatprep.subr.mxu0 0.0
    %1458 = vmatpush2.msra.mxu0 0.0
    %1459 = vmatprep.subr.mxu0 0.0
    %1460 = vmatpush2.msra.mxu0 0.0
    %1461 = vmatprep.subr.mxu0 0.0
    %1462 = vmatpush2.msra.mxu0 0.0
    %1463 = vmatprep.subr.mxu0 0.0
    %1464 = vmatpush2.msra.mxu0 0.0
    %1465 = vmatprep.subr.mxu0 0.0
    %1466 = vmatpush2.msra.mxu0 0.0
    %1467 = vmatprep.subr.mxu0 0.0
    %1468 = vmatpush2.msra.mxu0 0.0
    %1469 = vmatprep.subr.mxu0 0.0
    %1470 = vmatpush2.msra.mxu0 0.0
    %1471 = vmatprep.subr.mxu0 0.0
    %1472 = vmatpush2.msra.mxu0 0.0
    %1473 = vmatprep.subr.mxu0 0.0
    %1474 = vmatpush2.msra.mxu0 0.0
    %1475 = vmatprep.mubr.f32.mxu0 0.0
    %1476 = vmatmul.mubr.f32.gmra.mxu0 %v1332
    %v1477 = vpop.f32.mrf.mxu0
    %v1478 = vadd.f32 0.0, %v1477
    %v1479 = vpop.f32.mrf.mxu0
    %v1480 = vadd.f32 0.0, %v1479
    %1481 = vdwg.mxu0
    %v1482 = vadd.f32 %v1336, %v1407
    %v1483 = vadd.f32 %v1337, %v1409
    %v1484 = vadd.f32 %v1338, %v1478
    %v1485 = vadd.f32 %v1339, %v1480
    %v1486 = vxor.u32 %v1482, 2147483648
    %v1487 = vmul.f32 %v1486, 1.442695
    %v1488 = vpow.pop %v1487
    %v1489 = vadd.f32 %v1488, 1.0
    %v1490 = vrcp.pop %v1489
    %v1491 = vmul.f32 1.0, %v1490
    %v1492 = vxor.u32 %v1483, 2147483648
    %v1493 = vmul.f32 %v1492, 1.442695
    %v1494 = vpow.pop %v1493
    %v1495 = vadd.f32 %v1494, 1.0
    %v1496 = vrcp.pop %v1495
    %v1497 = vmul.f32 1.0, %v1496
    %v1498 = vtanh.pop %v1484
    %v1499 = vxor.u32 %v1485, 2147483648
    %v1500 = vmul.f32 %v1499, 1.442695
    %v1501 = vpow.pop %v1500
    %v1502 = vadd.f32 %v1501, 1.0
    %v1503 = vrcp.pop %v1502
    %v1504 = vmul.f32 1.0, %v1503
    %v1505 = vmul.f32 %v1497, %v1330
    %v1506 = vmul.f32 %v1491, %v1498
    %v1507 = vadd.f32 %v1505, %v1506
    %v1508 = vtanh.pop %v1507
    %v1509 = vmul.f32 %v1504, %v1508
    %s1510 = smul.u32 6, 4
    %s1511 = smul.addr %s1510, 8
    %s1512 = scalar_lea.vmem [#allocation2], %s1511
    %v1513 = vld [vmem:[%s1512] sm:$0xff]
    %v1514 = vld [vmem:[%s1512 + $0x8] sm:$0xff]
    %v1515 = vld [vmem:[%s1512 + $0x10] sm:$0xff]
    %v1516 = vld [vmem:[%s1512 + $0x18] sm:$0xff]
    %1517 = vmatprep.subr.mxu0 %v452
    %1518 = vmatpush1.msra.mxu0 %v451
    %1519 = vmatprep.subr.mxu0 %v448
    %1520 = vmatpush1.msra.mxu0 %v447
    %1521 = vmatprep.subr.mxu0 %v444
    %1522 = vmatpush1.msra.mxu0 %v443
    %1523 = vmatprep.subr.mxu0 %v440
    %1524 = vmatpush1.msra.mxu0 %v439
    %1525 = vmatprep.subr.mxu0 %v436
    %1526 = vmatpush1.msra.mxu0 %v435
    %1527 = vmatprep.subr.mxu0 %v432
    %1528 = vmatpush1.msra.mxu0 %v431
    %1529 = vmatprep.subr.mxu0 %v428
    %1530 = vmatpush1.msra.mxu0 %v427
    %1531 = vmatprep.subr.mxu0 %v424
    %1532 = vmatpush1.msra.mxu0 %v423
    %1533 = vmatprep.subr.mxu0 %v420
    %1534 = vmatpush1.msra.mxu0 %v419
    %1535 = vmatprep.subr.mxu0 %v416
    %1536 = vmatpush1.msra.mxu0 %v415
    %1537 = vmatprep.subr.mxu0 %v412
    %1538 = vmatpush1.msra.mxu0 %v411
    %1539 = vmatprep.subr.mxu0 %v408
    %1540 = vmatpush1.msra.mxu0 %v407
    %1541 = vmatprep.subr.mxu0 %v404
    %1542 = vmatpush1.msra.mxu0 %v403
    %1543 = vmatprep.subr.mxu0 %v400
    %1544 = vmatpush1.msra.mxu0 %v399
    %1545 = vmatprep.subr.mxu0 %v396
    %1546 = vmatpush1.msra.mxu0 %v395
    %1547 = vmatprep.subr.mxu0 %v392
    %1548 = vmatpush1.msra.mxu0 %v391
    %1549 = vmatprep.subr.mxu0 0.0
    %1550 = vmatpush2.msra.mxu0 0.0
    %1551 = vmatprep.subr.mxu0 0.0
    %1552 = vmatpush2.msra.mxu0 0.0
    %1553 = vmatprep.subr.mxu0 0.0
    %1554 = vmatpush2.msra.mxu0 0.0
    %1555 = vmatprep.subr.mxu0 0.0
    %1556 = vmatpush2.msra.mxu0 0.0
    %1557 = vmatprep.subr.mxu0 0.0
    %1558 = vmatpush2.msra.mxu0 0.0
    %1559 = vmatprep.subr.mxu0 0.0
    %1560 = vmatpush2.msra.mxu0 0.0
    %1561 = vmatprep.subr.mxu0 0.0
    %1562 = vmatpush2.msra.mxu0 0.0
    %1563 = vmatprep.subr.mxu0 0.0
    %1564 = vmatpush2.msra.mxu0 0.0
    %1565 = vmatprep.subr.mxu0 0.0
    %1566 = vmatpush2.msra.mxu0 0.0
    %1567 = vmatprep.subr.mxu0 0.0
    %1568 = vmatpush2.msra.mxu0 0.0
    %1569 = vmatprep.subr.mxu0 0.0
    %1570 = vmatpush2.msra.mxu0 0.0
    %1571 = vmatprep.subr.mxu0 0.0
    %1572 = vmatpush2.msra.mxu0 0.0
    %1573 = vmatprep.subr.mxu0 0.0
    %1574 = vmatpush2.msra.mxu0 0.0
    %1575 = vmatprep.subr.mxu0 0.0
    %1576 = vmatpush2.msra.mxu0 0.0
    %1577 = vmatprep.subr.mxu0 0.0
    %1578 = vmatpush2.msra.mxu0 0.0
    %1579 = vmatprep.subr.mxu0 0.0
    %1580 = vmatpush2.msra.mxu0 0.0
    %1581 = vmatprep.mubr.f32.mxu0 0.0
    %1582 = vmatmul.mubr.f32.gmra.mxu0 %v1509
    %v1583 = vpop.f32.mrf.mxu0
    %v1584 = vadd.f32 0.0, %v1583
    %v1585 = vpop.f32.mrf.mxu0
    %v1586 = vadd.f32 0.0, %v1585
    %1587 = vdwg.mxu0
    %1588 = vmatprep.subr.mxu0 %v454
    %1589 = vmatpush1.msra.mxu0 %v453
    %1590 = vmatprep.subr.mxu0 %v450
    %1591 = vmatpush1.msra.mxu0 %v449
    %1592 = vmatprep.subr.mxu0 %v446
    %1593 = vmatpush1.msra.mxu0 %v445
    %1594 = vmatprep.subr.mxu0 %v442
    %1595 = vmatpush1.msra.mxu0 %v441
    %1596 = vmatprep.subr.mxu0 %v438
    %1597 = vmatpush1.msra.mxu0 %v437
    %1598 = vmatprep.subr.mxu0 %v434
    %1599 = vmatpush1.msra.mxu0 %v433
    %1600 = vmatprep.subr.mxu0 %v430
    %1601 = vmatpush1.msra.mxu0 %v429
    %1602 = vmatprep.subr.mxu0 %v426
    %1603 = vmatpush1.msra.mxu0 %v425
    %1604 = vmatprep.subr.mxu0 %v422
    %1605 = vmatpush1.msra.mxu0 %v421
    %1606 = vmatprep.subr.mxu0 %v418
    %1607 = vmatpush1.msra.mxu0 %v417
    %1608 = vmatprep.subr.mxu0 %v414
    %1609 = vmatpush1.msra.mxu0 %v413
    %1610 = vmatprep.subr.mxu0 %v410
    %1611 = vmatpush1.msra.mxu0 %v409
    %1612 = vmatprep.subr.mxu0 %v406
    %1613 = vmatpush1.msra.mxu0 %v405
    %1614 = vmatprep.subr.mxu0 %v402
    %1615 = vmatpush1.msra.mxu0 %v401
    %1616 = vmatprep.subr.mxu0 %v398
    %1617 = vmatpush1.msra.mxu0 %v397
    %1618 = vmatprep.subr.mxu0 %v394
    %1619 = vmatpush1.msra.mxu0 %v393
    %1620 = vmatprep.subr.mxu0 0.0
    %1621 = vmatpush2.msra.mxu0 0.0
    %1622 = vmatprep.subr.mxu0 0.0
    %1623 = vmatpush2.msra.mxu0 0.0
    %1624 = vmatprep.subr.mxu0 0.0
    %1625 = vmatpush2.msra.mxu0 0.0
    %1626 = vmatprep.subr.mxu0 0.0
    %1627 = vmatpush2.msra.mxu0 0.0
    %1628 = vmatprep.subr.mxu0 0.0
    %1629 = vmatpush2.msra.mxu0 0.0
    %1630 = vmatprep.subr.mxu0 0.0
    %1631 = vmatpush2.msra.mxu0 0.0
    %1632 = vmatprep.subr.mxu0 0.0
    %1633 = vmatpush2.msra.mxu0 0.0
    %1634 = vmatprep.subr.mxu0 0.0
    %1635 = vmatpush2.msra.mxu0 0.0
    %1636 = vmatprep.subr.mxu0 0.0
    %1637 = vmatpush2.msra.mxu0 0.0
    %1638 = vmatprep.subr.mxu0 0.0
    %1639 = vmatpush2.msra.mxu0 0.0
    %1640 = vmatprep.subr.mxu0 0.0
    %1641 = vmatpush2.msra.mxu0 0.0
    %1642 = vmatprep.subr.mxu0 0.0
    %1643 = vmatpush2.msra.mxu0 0.0
    %1644 = vmatprep.subr.mxu0 0.0
    %1645 = vmatpush2.msra.mxu0 0.0
    %1646 = vmatprep.subr.mxu0 0.0
    %1647 = vmatpush2.msra.mxu0 0.0
    %1648 = vmatprep.subr.mxu0 0.0
    %1649 = vmatpush2.msra.mxu0 0.0
    %1650 = vmatprep.subr.mxu0 0.0
    %1651 = vmatpush2.msra.mxu0 0.0
    %1652 = vmatprep.mubr.f32.mxu0 0.0
    %1653 = vmatmul.mubr.f32.gmra.mxu0 %v1509
    %v1654 = vpop.f32.mrf.mxu0
    %v1655 = vadd.f32 0.0, %v1654
    %v1656 = vpop.f32.mrf.mxu0
    %v1657 = vadd.f32 0.0, %v1656
    %1658 = vdwg.mxu0
    %v1659 = vadd.f32 %v1513, %v1584
    %v1660 = vadd.f32 %v1514, %v1586
    %v1661 = vadd.f32 %v1515, %v1655
    %v1662 = vadd.f32 %v1516, %v1657
    %v1663 = vxor.u32 %v1659, 2147483648
    %v1664 = vmul.f32 %v1663, 1.442695
    %v1665 = vpow.pop %v1664
    %v1666 = vadd.f32 %v1665, 1.0
    %v1667 = vrcp.pop %v1666
    %v1668 = vmul.f32 1.0, %v1667
    %v1669 = vxor.u32 %v1660, 2147483648
    %v1670 = vmul.f32 %v1669, 1.442695
    %v1671 = vpow.pop %v1670
    %v1672 = vadd.f32 %v1671, 1.0
    %v1673 = vrcp.pop %v1672
    %v1674 = vmul.f32 1.0, %v1673
    %v1675 = vtanh.pop %v1661
    %v1676 = vxor.u32 %v1662, 2147483648
    %v1677 = vmul.f32 %v1676, 1.442695
    %v1678 = vpow.pop %v1677
    %v1679 = vadd.f32 %v1678, 1.0
    %v1680 = vrcp.pop %v1679
    %v1681 = vmul.f32 1.0, %v1680
    %v1682 = vmul.f32 %v1674, %v1507
    %v1683 = vmul.f32 %v1668, %v1675
    %v1684 = vadd.f32 %v1682, %v1683
    %v1685 = vtanh.pop %v1684
    %v1686 = vmul.f32 %v1681, %v1685
    %s1687 = smul.u32 7, 4
    %s1688 = smul.addr %s1687, 8
    %s1689 = scalar_lea.vmem [#allocation2], %s1688
    %v1690 = vld [vmem:[%s1689] sm:$0xff]
    %v1691 = vld [vmem:[%s1689 + $0x8] sm:$0xff]
    %v1692 = vld [vmem:[%s1689 + $0x10] sm:$0xff]
    %v1693 = vld [vmem:[%s1689 + $0x18] sm:$0xff]
    %1694 = vmatprep.subr.mxu0 %v452
    %1695 = vmatpush1.msra.mxu0 %v451
    %1696 = vmatprep.subr.mxu0 %v448
    %1697 = vmatpush1.msra.mxu0 %v447
    %1698 = vmatprep.subr.mxu0 %v444
    %1699 = vmatpush1.msra.mxu0 %v443
    %1700 = vmatprep.subr.mxu0 %v440
    %1701 = vmatpush1.msra.mxu0 %v439
    %1702 = vmatprep.subr.mxu0 %v436
    %1703 = vmatpush1.msra.mxu0 %v435
    %1704 = vmatprep.subr.mxu0 %v432
    %1705 = vmatpush1.msra.mxu0 %v431
    %1706 = vmatprep.subr.mxu0 %v428
    %1707 = vmatpush1.msra.mxu0 %v427
    %1708 = vmatprep.subr.mxu0 %v424
    %1709 = vmatpush1.msra.mxu0 %v423
    %1710 = vmatprep.subr.mxu0 %v420
    %1711 = vmatpush1.msra.mxu0 %v419
    %1712 = vmatprep.subr.mxu0 %v416
    %1713 = vmatpush1.msra.mxu0 %v415
    %1714 = vmatprep.subr.mxu0 %v412
    %1715 = vmatpush1.msra.mxu0 %v411
    %1716 = vmatprep.subr.mxu0 %v408
    %1717 = vmatpush1.msra.mxu0 %v407
    %1718 = vmatprep.subr.mxu0 %v404
    %1719 = vmatpush1.msra.mxu0 %v403
    %1720 = vmatprep.subr.mxu0 %v400
    %1721 = vmatpush1.msra.mxu0 %v399
    %1722 = vmatprep.subr.mxu0 %v396
    %1723 = vmatpush1.msra.mxu0 %v395
    %1724 = vmatprep.subr.mxu0 %v392
    %1725 = vmatpush1.msra.mxu0 %v391
    %1726 = vmatprep.subr.mxu0 0.0
    %1727 = vmatpush2.msra.mxu0 0.0
    %1728 = vmatprep.subr.mxu0 0.0
    %1729 = vmatpush2.msra.mxu0 0.0
    %1730 = vmatprep.subr.mxu0 0.0
    %1731 = vmatpush2.msra.mxu0 0.0
    %1732 = vmatprep.subr.mxu0 0.0
    %1733 = vmatpush2.msra.mxu0 0.0
    %1734 = vmatprep.subr.mxu0 0.0
    %1735 = vmatpush2.msra.mxu0 0.0
    %1736 = vmatprep.subr.mxu0 0.0
    %1737 = vmatpush2.msra.mxu0 0.0
    %1738 = vmatprep.subr.mxu0 0.0
    %1739 = vmatpush2.msra.mxu0 0.0
    %1740 = vmatprep.subr.mxu0 0.0
    %1741 = vmatpush2.msra.mxu0 0.0
    %1742 = vmatprep.subr.mxu0 0.0
    %1743 = vmatpush2.msra.mxu0 0.0
    %1744 = vmatprep.subr.mxu0 0.0
    %1745 = vmatpush2.msra.mxu0 0.0
    %1746 = vmatprep.subr.mxu0 0.0
    %1747 = vmatpush2.msra.mxu0 0.0
    %1748 = vmatprep.subr.mxu0 0.0
    %1749 = vmatpush2.msra.mxu0 0.0
    %1750 = vmatprep.subr.mxu0 0.0
    %1751 = vmatpush2.msra.mxu0 0.0
    %1752 = vmatprep.subr.mxu0 0.0
    %1753 = vmatpush2.msra.mxu0 0.0
    %1754 = vmatprep.subr.mxu0 0.0
    %1755 = vmatpush2.msra.mxu0 0.0
    %1756 = vmatprep.subr.mxu0 0.0
    %1757 = vmatpush2.msra.mxu0 0.0
    %1758 = vmatprep.mubr.f32.mxu0 0.0
    %1759 = vmatmul.mubr.f32.gmra.mxu0 %v1686
    %v1760 = vpop.f32.mrf.mxu0
    %v1761 = vadd.f32 0.0, %v1760
    %v1762 = vpop.f32.mrf.mxu0
    %v1763 = vadd.f32 0.0, %v1762
    %1764 = vdwg.mxu0
    %1765 = vmatprep.subr.mxu0 %v454
    %1766 = vmatpush1.msra.mxu0 %v453
    %1767 = vmatprep.subr.mxu0 %v450
    %1768 = vmatpush1.msra.mxu0 %v449
    %1769 = vmatprep.subr.mxu0 %v446
    %1770 = vmatpush1.msra.mxu0 %v445
    %1771 = vmatprep.subr.mxu0 %v442
    %1772 = vmatpush1.msra.mxu0 %v441
    %1773 = vmatprep.subr.mxu0 %v438
    %1774 = vmatpush1.msra.mxu0 %v437
    %1775 = vmatprep.subr.mxu0 %v434
    %1776 = vmatpush1.msra.mxu0 %v433
    %1777 = vmatprep.subr.mxu0 %v430
    %1778 = vmatpush1.msra.mxu0 %v429
    %1779 = vmatprep.subr.mxu0 %v426
    %1780 = vmatpush1.msra.mxu0 %v425
    %1781 = vmatprep.subr.mxu0 %v422
    %1782 = vmatpush1.msra.mxu0 %v421
    %1783 = vmatprep.subr.mxu0 %v418
    %1784 = vmatpush1.msra.mxu0 %v417
    %1785 = vmatprep.subr.mxu0 %v414
    %1786 = vmatpush1.msra.mxu0 %v413
    %1787 = vmatprep.subr.mxu0 %v410
    %1788 = vmatpush1.msra.mxu0 %v409
    %1789 = vmatprep.subr.mxu0 %v406
    %1790 = vmatpush1.msra.mxu0 %v405
    %1791 = vmatprep.subr.mxu0 %v402
    %1792 = vmatpush1.msra.mxu0 %v401
    %1793 = vmatprep.subr.mxu0 %v398
    %1794 = vmatpush1.msra.mxu0 %v397
    %1795 = vmatprep.subr.mxu0 %v394
    %1796 = vmatpush1.msra.mxu0 %v393
    %1797 = vmatprep.subr.mxu0 0.0
    %1798 = vmatpush2.msra.mxu0 0.0
    %1799 = vmatprep.subr.mxu0 0.0
    %1800 = vmatpush2.msra.mxu0 0.0
    %1801 = vmatprep.subr.mxu0 0.0
    %1802 = vmatpush2.msra.mxu0 0.0
    %1803 = vmatprep.subr.mxu0 0.0
    %1804 = vmatpush2.msra.mxu0 0.0
    %1805 = vmatprep.subr.mxu0 0.0
    %1806 = vmatpush2.msra.mxu0 0.0
    %1807 = vmatprep.subr.mxu0 0.0
    %1808 = vmatpush2.msra.mxu0 0.0
    %1809 = vmatprep.subr.mxu0 0.0
    %1810 = vmatpush2.msra.mxu0 0.0
    %1811 = vmatprep.subr.mxu0 0.0
    %1812 = vmatpush2.msra.mxu0 0.0
    %1813 = vmatprep.subr.mxu0 0.0
    %1814 = vmatpush2.msra.mxu0 0.0
    %1815 = vmatprep.subr.mxu0 0.0
    %1816 = vmatpush2.msra.mxu0 0.0
    %1817 = vmatprep.subr.mxu0 0.0
    %1818 = vmatpush2.msra.mxu0 0.0
    %1819 = vmatprep.subr.mxu0 0.0
    %1820 = vmatpush2.msra.mxu0 0.0
    %1821 = vmatprep.subr.mxu0 0.0
    %1822 = vmatpush2.msra.mxu0 0.0
    %1823 = vmatprep.subr.mxu0 0.0
    %1824 = vmatpush2.msra.mxu0 0.0
    %1825 = vmatprep.subr.mxu0 0.0
    %1826 = vmatpush2.msra.mxu0 0.0
    %1827 = vmatprep.subr.mxu0 0.0
    %1828 = vmatpush2.msra.mxu0 0.0
    %1829 = vmatprep.mubr.f32.mxu0 0.0
    %1830 = vmatmul.mubr.f32.gmra.mxu0 %v1686
    %v1831 = vpop.f32.mrf.mxu0
    %v1832 = vadd.f32 0.0, %v1831
    %v1833 = vpop.f32.mrf.mxu0
    %v1834 = vadd.f32 0.0, %v1833
    %1835 = vdwg.mxu0
    %v1836 = vadd.f32 %v1690, %v1761
    %v1837 = vadd.f32 %v1691, %v1763
    %v1838 = vadd.f32 %v1692, %v1832
    %v1839 = vadd.f32 %v1693, %v1834
    %v1840 = vxor.u32 %v1836, 2147483648
    %v1841 = vmul.f32 %v1840, 1.442695
    %v1842 = vpow.pop %v1841
    %v1843 = vadd.f32 %v1842, 1.0
    %v1844 = vrcp.pop %v1843
    %v1845 = vmul.f32 1.0, %v1844
    %v1846 = vxor.u32 %v1837, 2147483648
    %v1847 = vmul.f32 %v1846, 1.442695
    %v1848 = vpow.pop %v1847
    %v1849 = vadd.f32 %v1848, 1.0
    %v1850 = vrcp.pop %v1849
    %v1851 = vmul.f32 1.0, %v1850
    %v1852 = vtanh.pop %v1838
    %v1853 = vxor.u32 %v1839, 2147483648
    %v1854 = vmul.f32 %v1853, 1.442695
    %v1855 = vpow.pop %v1854
    %v1856 = vadd.f32 %v1855, 1.0
    %v1857 = vrcp.pop %v1856
    %v1858 = vmul.f32 1.0, %v1857
    %v1859 = vmul.f32 %v1851, %v1684
    %v1860 = vmul.f32 %v1845, %v1852
    %v1861 = vadd.f32 %v1859, %v1860
    %v1862 = vtanh.pop %v1861
    %v1863 = vmul.f32 %v1858, %v1862
    %1864 = vst [vmem:[#allocation3] sm:$0xff] %v1863
    %1865 = vst [vmem:[#allocation4] sm:$0xff] %v1861
    // Predicated region
    $region38: #{tpu_custom_call.1} parent=1 // pred_check
      %p1866 = pneg %p55
    $region39: #{tpu_custom_call.1} parent=1 // pred_check_branch
      %1868 = sbr.rel (%p1866) target = $region41
    $region40: #{tpu_custom_call.1} parent=1 // pred_region
      %v1869 = vld [vmem:[#allocation8] sm:$0xff]
      %v1870 = vld [vmem:[#allocation8 + $0x8] sm:$0xff]
      %v1871 = vld [vmem:[#allocation8 + $0x10] sm:$0xff]
      %v1872 = vld [vmem:[#allocation8 + $0x18] sm:$0xff]
      %v1873 = vld [vmem:[#allocation8 + $0x20] sm:$0xff]
      %v1874 = vld [vmem:[#allocation8 + $0x28] sm:$0xff]
      %v1875 = vld [vmem:[#allocation8 + $0x30] sm:$0xff]
      %v1876 = vld [vmem:[#allocation8 + $0x38] sm:$0xff]
      %v1877 = vld [vmem:[#allocation8 + $0x40] sm:$0xff]
      %v1878 = vld [vmem:[#allocation8 + $0x48] sm:$0xff]
      %v1879 = vld [vmem:[#allocation8 + $0x50] sm:$0xff]
      %v1880 = vld [vmem:[#allocation8 + $0x58] sm:$0xff]
      %v1881 = vld [vmem:[#allocation8 + $0x60] sm:$0xff]
      %v1882 = vld [vmem:[#allocation8 + $0x68] sm:$0xff]
      %v1883 = vld [vmem:[#allocation8 + $0x70] sm:$0xff]
      %v1884 = vld [vmem:[#allocation8 + $0x78] sm:$0xff]
      %v1885 = vld [vmem:[#allocation8 + $0x80] sm:$0xff]
      %v1886 = vld [vmem:[#allocation8 + $0x88] sm:$0xff]
      %v1887 = vld [vmem:[#allocation8 + $0x90] sm:$0xff]
      %v1888 = vld [vmem:[#allocation8 + $0x98] sm:$0xff]
      %v1889 = vld [vmem:[#allocation8 + $0xa0] sm:$0xff]
      %v1890 = vld [vmem:[#allocation8 + $0xa8] sm:$0xff]
      %v1891 = vld [vmem:[#allocation8 + $0xb0] sm:$0xff]
      %v1892 = vld [vmem:[#allocation8 + $0xb8] sm:$0xff]
      %v1893 = vld [vmem:[#allocation8 + $0xc0] sm:$0xff]
      %v1894 = vld [vmem:[#allocation8 + $0xc8] sm:$0xff]
      %v1895 = vld [vmem:[#allocation8 + $0xd0] sm:$0xff]
      %v1896 = vld [vmem:[#allocation8 + $0xd8] sm:$0xff]
      %v1897 = vld [vmem:[#allocation8 + $0xe0] sm:$0xff]
      %v1898 = vld [vmem:[#allocation8 + $0xe8] sm:$0xff]
      %v1899 = vld [vmem:[#allocation8 + $0xf0] sm:$0xff]
      %v1900 = vld [vmem:[#allocation8 + $0xf8] sm:$0xff]
      %v1901 = vld [vmem:[%s5] sm:$0x3]
      %v1903 = vlaneseq
      %v1904 = vshrl.u32 %v1903, 7
      %v1905 = vsub.s32 0, %v1904
      %v1906 = vrot.slane %v1901, %v1905
      %v1907 = vlaneseq
      %v1908 = vshrl.u32 %v1907, 7
      %v1909 = vsub.s32 1, %v1908
      %v1910 = vrot.slane %v1901, %v1909
      %1913 = vmatprep.subr.mxu0 %v1900
      %1914 = vmatpush1.msra.mxu0 %v1899
      %1915 = vmatprep.subr.mxu0 %v1898
      %1916 = vmatpush1.msra.mxu0 %v1897
      %1917 = vmatprep.subr.mxu0 %v1896
      %1918 = vmatpush1.msra.mxu0 %v1895
      %1919 = vmatprep.subr.mxu0 %v1894
      %1920 = vmatpush1.msra.mxu0 %v1893
      %1921 = vmatprep.subr.mxu0 %v1892
      %1922 = vmatpush1.msra.mxu0 %v1891
      %1923 = vmatprep.subr.mxu0 %v1890
      %1924 = vmatpush1.msra.mxu0 %v1889
      %1925 = vmatprep.subr.mxu0 %v1888
      %1926 = vmatpush1.msra.mxu0 %v1887
      %1927 = vmatprep.subr.mxu0 %v1886
      %1928 = vmatpush1.msra.mxu0 %v1885
      %1929 = vmatprep.subr.mxu0 %v1884
      %1930 = vmatpush1.msra.mxu0 %v1883
      %1931 = vmatprep.subr.mxu0 %v1882
      %1932 = vmatpush1.msra.mxu0 %v1881
      %1933 = vmatprep.subr.mxu0 %v1880
      %1934 = vmatpush1.msra.mxu0 %v1879
      %1935 = vmatprep.subr.mxu0 %v1878
      %1936 = vmatpush1.msra.mxu0 %v1877
      %1937 = vmatprep.subr.mxu0 %v1876
      %1938 = vmatpush1.msra.mxu0 %v1875
      %1939 = vmatprep.subr.mxu0 %v1874
      %1940 = vmatpush1.msra.mxu0 %v1873
      %1941 = vmatprep.subr.mxu0 %v1872
      %1942 = vmatpush1.msra.mxu0 %v1871
      %1943 = vmatprep.subr.mxu0 %v1870
      %1944 = vmatpush1.msra.mxu0 %v1869
      %1945 = vmatprep.subr.mxu0 0.0
      %1946 = vmatpush2.msra.mxu0 0.0
      %1947 = vmatprep.subr.mxu0 0.0
      %1948 = vmatpush2.msra.mxu0 0.0
      %1949 = vmatprep.subr.mxu0 0.0
      %1950 = vmatpush2.msra.mxu0 0.0
      %1951 = vmatprep.subr.mxu0 0.0
      %1952 = vmatpush2.msra.mxu0 0.0
      %1953 = vmatprep.subr.mxu0 0.0
      %1954 = vmatpush2.msra.mxu0 0.0
      %1955 = vmatprep.subr.mxu0 0.0
      %1956 = vmatpush2.msra.mxu0 0.0
      %1957 = vmatprep.subr.mxu0 0.0
      %1958 = vmatpush2.msra.mxu0 0.0
      %1959 = vmatprep.subr.mxu0 0.0
      %1960 = vmatpush2.msra.mxu0 0.0
      %1961 = vmatprep.subr.mxu0 0.0
      %1962 = vmatpush2.msra.mxu0 0.0
      %1963 = vmatprep.subr.mxu0 0.0
      %1964 = vmatpush2.msra.mxu0 0.0
      %1965 = vmatprep.subr.mxu0 0.0
      %1966 = vmatpush2.msra.mxu0 0.0
      %1967 = vmatprep.subr.mxu0 0.0
      %1968 = vmatpush2.msra.mxu0 0.0
      %1969 = vmatprep.subr.mxu0 0.0
      %1970 = vmatpush2.msra.mxu0 0.0
      %1971 = vmatprep.subr.mxu0 0.0
      %1972 = vmatpush2.msra.mxu0 0.0
      %1973 = vmatprep.subr.mxu0 0.0
      %1974 = vmatpush2.msra.mxu0 0.0
      %1975 = vmatprep.subr.mxu0 0.0
      %1976 = vmatpush2.msra.mxu0 0.0
      %1977 = vmatprep.mubr.f32.mxu0 0.0
      %1978 = vmatmul.mubr.f32.gmra.mxu0 %v1863
      %v1979 = vpop.f32.mrf.mxu0
      %v1980 = vadd.f32 %v1906, %v1979
      %v1981 = vpop.f32.mrf.mxu0
      %v1982 = vadd.f32 %v1910, %v1981
      %1983 = vdwg.mxu0
      %1984 = vst [vmem:[#allocation10] sm:$0xff] %v1980
      %1985 = vst [vmem:[#allocation10 + $0x8] sm:$0xff] %v1982
      %1986 = vst [vmem:[#allocation11] sm:$0xff] %v1863
    $region41: #{tpu_custom_call.1} parent=1 // pred_fallthru
      _
    // Predicated region
    $region42: #{tpu_custom_call.1} parent=1 // pred_check
      _
    $region43: #{tpu_custom_call.1} parent=1 // pred_check_branch
      %1988 = sbr.rel (0) target = $region45
    $region44: #{tpu_custom_call.1} parent=1 // pred_region
      %s1990 = ssub.s32 256, 256
      %1991 = vsyncadd [#allocation7], %s1990
      %s1993 = sshll.u32 [#allocation10], 4
      %s1994 = int_to_ptr.vmem [resolvable:$true] %s1993
      %1996 = dma.vmem_to_hbm [thread:$0]  %s1994, 256, %s6, [#allocation7]
    $region45: #{tpu_custom_call.1} parent=1 // pred_fallthru
      _
    // Predicated region
    $region46: #{tpu_custom_call.1} parent=1 // pred_check
      _
    $region47: #{tpu_custom_call.1} parent=1 // pred_check_branch
      %1998 = sbr.rel (0) target = $region49
    $region48: #{tpu_custom_call.1} parent=1 // pred_region
      %s2000 = ssub.s32 128, 128
      %2001 = vsyncadd [#allocation12], %s2000
      %s2003 = sshll.u32 [#allocation11], 4
      %s2004 = int_to_ptr.vmem [resolvable:$true] %s2003
      %2006 = dma.vmem_to_hbm [thread:$0]  %s2004, 128, %s7, [#allocation12]
    $region49: #{tpu_custom_call.1} parent=1 // pred_fallthru
      _
    // Predicated region
    $region50: #{tpu_custom_call.1} parent=1 // pred_check
      _
    $region51: #{tpu_custom_call.1} parent=1 // pred_check_branch
      %2008 = sbr.rel (0) target = $region53
    $region52: #{tpu_custom_call.1} parent=1 // pred_region
      %2009 = dma.done [#allocation7], 256
    $region53: #{tpu_custom_call.1} parent=1 // pred_fallthru
      _
    // Predicated region
    $region54: #{tpu_custom_call.1} parent=1 // pred_check
      _
    $region55: #{tpu_custom_call.1} parent=1 // pred_check_branch
      %2011 = sbr.rel (0) target = $region57
    $region56: #{tpu_custom_call.1} parent=1 // pred_region
      %2012 = dma.done [#allocation12], 128
    $region57: #{tpu_custom_call.1} parent=1 // pred_fallthru
      _
    %2013 = vsyncpa [#allocation6], 1
    %2014 = vsyncpa [#allocation9], 1
    %2015 = vsyncpa [#allocation7], 1
    %2016 = vsyncpa [#allocation12], 1

</llo_original>
